<compile_context>
chip_gen: v7x
topology: tpu7x:2x2x1
jax: 0.10.0
libtpu: 0.0.40
codegen_flags: <defaults>
</compile_context>

<pallas_src>
import jax
import jax.numpy as jnp
from jax.experimental import pallas as pl
from jax.experimental.pallas import tpu as pltpu  # noqa: F401  (TPU backend assumed)

# ---------------- model dimensions (small, consistent with the forward) -----
B = 2          # batch
C_IN = 4       # input channels
H = W = 16     # image spatial
PATCH = 4      # patch size
HP = H // PATCH
WP = W // PATCH
N_TOK = HP * WP                # 16 image tokens
P_DIM = C_IN * PATCH * PATCH   # 64 flattened patch dim
D = 32                         # embed dim
NUM_HEADS = 4
HEAD_DIM = D // NUM_HEADS      # 8
MLP_DIM = 64
T_Q = 8                        # learned decoder query tokens (0 = det, 1 = mask)
C_DET = 4                      # detection head output dim

BN = B * N_TOK                 # 32 rows (batch folded into rows)
BT = B * T_Q                   # 16 decoder query rows
OUT_LANES = 128                # lane-dense single output slab width

_F32 = jnp.float32
_BF16 = jnp.bfloat16           # weights / MXU inputs

# ------------------------- parameter-slab layout ------------------------------
# bf16 weight slab (lane width 64, row offsets 16-aligned for bf16 tiling).
_W_LANES = 64
_W_SPECS = [
    ("pe_w",  P_DIM,   D),      # patch embed
    ("wq",    D,       D),      # encoder attention (heads stacked on lanes)
    ("wk",    D,       D),
    ("wv",    D,       D),
    ("wproj", D,       D),
    ("wfc1",  D,       MLP_DIM),
    ("wfc2",  MLP_DIM, D),
    ("wq_d",  D,       D),      # decoder cross-attention
    ("wk_d",  D,       D),
    ("wv_d",  D,       D),
    ("wo_d",  D,       D),
    ("wdet",  D,       C_DET),
    ("wmask", D,       D),
]

# f32 slab: multi-row constants first, then 1-row biases / LN params.
_F_LANES = 64
_F_SPECS = [
    ("tok_tiled", BT, D),       # learned query tokens tiled over batch
    ("pe_tiled",  BN, D),       # dense PE tiled over batch
    ("enc_mask",  BN, BN),      # block-diagonal -1e9 mask (encoder self-attn)
    ("dec_mask",  BT, BN),      # block-diagonal -1e9 mask (decoder cross-attn)
    ("pe_b", 1, D), ("ln1_g", 1, D), ("ln1_b", 1, D),
    ("bq", 1, D), ("bk", 1, D), ("bv", 1, D), ("bproj", 1, D),
    ("ln2_g", 1, D), ("ln2_b", 1, D),
    ("bfc1", 1, MLP_DIM), ("bfc2", 1, D),
    ("bq_d", 1, D), ("bk_d", 1, D), ("bv_d", 1, D), ("bo_d", 1, D),
    ("ln_d_g", 1, D), ("ln_d_b", 1, D),
    ("bdet", 1, C_DET), ("bmask", 1, D),
]


def _make_offsets(specs, align):
    off, r = {}, 0
    for name, rows, cols in specs:
        off[name] = (r, rows, cols)
        r += ((rows + align - 1) // align) * align   # keep slices tile-aligned
    return off, r


_W_OFF, _W_ROWS = _make_offsets(_W_SPECS, 16)   # bf16 sublane tile = 16
_F_OFF, _F_ROWS = _make_offsets(_F_SPECS, 8)    # f32 sublane tile = 8


# ---------------------------- in-kernel helpers ------------------------------
def _ln(v, g, b, eps=1e-6):
    mu = jnp.mean(v, axis=-1, keepdims=True)
    var = jnp.mean((v - mu) * (v - mu), axis=-1, keepdims=True)
    return (v - mu) * jax.lax.rsqrt(var + eps) * g + b


def _softmax(s):
    s = s - jnp.max(s, axis=-1, keepdims=True)
    p = jnp.exp(s)
    # EUP reciprocal instead of a VALU divide.
    return p * pl.reciprocal(jnp.sum(p, axis=-1, keepdims=True), approx=True)


# ------------------------------ fused kernel ---------------------------------
def vitu_kernel(xp_ref, w_ref, f_ref, out_ref):
    def Wt(name):                       # bf16 weight view (static slab slice)
        r, rows, cols = _W_OFF[name]
        return w_ref[r:r + rows, 0:cols]

    def Fv(name):                       # f32 constant view (static slab slice)
        r, rows, cols = _F_OFF[name]
        return f_ref[r:r + rows, 0:cols]

    def mm(a, b):                       # MXU matmul: bf16 in, f32 accumulate
        return jnp.dot(a.astype(_BF16), b, preferred_element_type=_F32)

    # ---------------- image encoder ----------------
    # Patch embed (Conv2d(C,D,PATCH,stride=PATCH) as matmul): [BN,P] @ [P,D].
    x = mm(xp_ref[...], Wt("pe_w")) + Fv("pe_b")                    # [BN, D] f32

    # Pre-LN multi-head self-attention; batch folded into rows, batched attention
    # realized as 2-D matmuls + block-diagonal mask (no 3-D reshapes).
    h16 = _ln(x, Fv("ln1_g"), Fv("ln1_b")).astype(_BF16)
    q = mm(h16, Wt("wq")) + Fv("bq")                                # [BN, D]
    k = mm(h16, Wt("wk")) + Fv("bk")
    v = mm(h16, Wt("wv")) + Fv("bv")

    enc_mask = Fv("enc_mask")                                       # [BN, BN]
    scale = 1.0 / (HEAD_DIM ** 0.5)
    q16 = (q * scale).astype(_BF16)
    k16 = k.astype(_BF16)
    v16 = v.astype(_BF16)

    heads = []
    for hi in range(NUM_HEADS):         # static 4-iter loop (HEAD_DIM=8 fixed)
        lo = hi * HEAD_DIM
        s = jnp.einsum("nd,md->nm", q16[:, lo:lo + HEAD_DIM],
                       k16[:, lo:lo + HEAD_DIM],
                       preferred_element_type=_F32) + enc_mask      # [BN, BN]
        p = _softmax(s)
        heads.append(jnp.dot(p.astype(_BF16), v16[:, lo:lo + HEAD_DIM],
                             preferred_element_type=_F32))          # [BN, hd]
    attn = jnp.concatenate(heads, axis=-1)                          # [BN, D]
    x = x + mm(attn, Wt("wproj")) + Fv("bproj")                     # residual 1

    # MLP.  TODO(synk): PyTorch nn.GELU default is exact erf; tanh approx used here.
    h2 = _ln(x, Fv("ln2_g"), Fv("ln2_b"))
    h2 = jax.nn.gelu(mm(h2, Wt("wfc1")) + Fv("bfc1"))
    h2 = mm(h2, Wt("wfc2")) + Fv("bfc2")
    img = x + h2                                                    # residual 2

    # ---------------- mask decoder ----------------
    src = img + Fv("pe_tiled")          # keys / mask-dot get +dense PE
    tok = Fv("tok_tiled")                                           # [BT, D]

    qd = mm(tok, Wt("wq_d")) + Fv("bq_d")                           # [BT, D]
    kd = mm(src, Wt("wk_d")) + Fv("bk_d")                           # [BN, D]
    vd = mm(img, Wt("wv_d")) + Fv("bv_d")                           # [BN, D]

    dscale = 1.0 / (D ** 0.5)
    s = jnp.einsum("td,nd->tn", (qd * dscale).astype(_BF16), kd.astype(_BF16),
                   preferred_element_type=_F32) + Fv("dec_mask")    # [BT, BN]
    p = _softmax(s)
    a = jnp.dot(p.astype(_BF16), vd.astype(_BF16),
                preferred_element_type=_F32)                        # [BT, D]

    tok2 = _ln(tok + mm(a, Wt("wo_d")) + Fv("bo_d"),
               Fv("ln_d_g"), Fv("ln_d_b"))
    t16 = tok2.astype(_BF16)

    det = jnp.dot(t16, Wt("wdet"), preferred_element_type=_F32) + Fv("bdet")
    m_emb = jnp.dot(t16, Wt("wmask"), preferred_element_type=_F32) + Fv("bmask")
    mask2d = jnp.einsum("td,nd->tn", m_emb.astype(_BF16), src.astype(_BF16),
                        preferred_element_type=_F32)                # [BT, BN]

    # Single lane-dense output slab: det | mask | zero padding -> one store.
    pad = jnp.zeros((BT, OUT_LANES - C_DET - BN), _F32)
    out_ref[...] = jnp.concatenate([det, mask2d, pad], axis=-1)


# ------------------------------ wrapper --------------------------------------
def extract_patches(x):
    # NCHW -> [B*N, C*P*P], flattened in (C, ph, pw) order (Conv2d weight order).
    b, c, _, _ = x.shape
    xp = x.reshape(b, c, HP, PATCH, WP, PATCH)
    xp = xp.transpose(0, 2, 4, 1, 3, 5)
    return xp.reshape(b * N_TOK, P_DIM).astype(_BF16)   # bf16 halves input DMA


@jax.jit
def vitu_forward(x, wslab, fslab):
    xp = extract_patches(x)                              # plain-JAX layout glue
    out = pl.pallas_call(
        vitu_kernel,
        out_shape=jax.ShapeDtypeStruct((BT, OUT_LANES), _F32),
    )(xp, wslab, fslab)
    # det token = query 0, mask token = query 1 (free static slices).
    det_pred = jnp.stack([out[b * T_Q, 0:C_DET] for b in range(B)], axis=0)
    mask = jnp.stack(
        [out[b * T_Q + 1, C_DET + b * N_TOK:C_DET + (b + 1) * N_TOK]
         for b in range(B)], axis=0)
    return det_pred, mask.reshape(B, 1, HP, WP)


# -------------------------- parameters, PE & packing --------------------------
def init_params(key):
    ks = iter(jax.random.split(key, 16))

    def w(shape, scale=0.02):
        return scale * jax.random.normal(next(ks), shape, dtype=_F32)

    def zeros(shape):
        return jnp.zeros(shape, _F32)

    def ones(shape):
        return jnp.ones(shape, _F32)

    return dict(
        # patch embed
        pe_w=w((P_DIM, D)), pe_b=zeros((1, D)),
        # encoder transformer block
        ln1_g=ones((1, D)), ln1_b=zeros((1, D)),
        wq=w((D, D)), bq=zeros((1, D)),
        wk=w((D, D)), bk=zeros((1, D)),
        wv=w((D, D)), bv=zeros((1, D)),
        wproj=w((D, D)), bproj=zeros((1, D)),
        ln2_g=ones((1, D)), ln2_b=zeros((1, D)),
        wfc1=w((D, MLP_DIM)), bfc1=zeros((1, MLP_DIM)),
        wfc2=w((MLP_DIM, D)), bfc2=zeros((1, D)),
        # decoder: learned query tokens + cross-attention + heads
        tokens=w((T_Q, D), scale=1.0),
        wq_d=w((D, D)), bq_d=zeros((1, D)),
        wk_d=w((D, D)), bk_d=zeros((1, D)),
        wv_d=w((D, D)), bv_d=zeros((1, D)),
        wo_d=w((D, D)), bo_d=zeros((1, D)),
        ln_d_g=ones((1, D)), ln_d_b=zeros((1, D)),
        wdet=w((D, C_DET)), bdet=zeros((1, C_DET)),
        wmask=w((D, D)), bmask=zeros((1, D)),
    )


def get_dense_pe():
    # Deterministic sin/cos dense positional encoding over the HPxWP grid, [N, D].
    ys, xs = jnp.meshgrid(jnp.arange(HP, dtype=_F32),
                          jnp.arange(WP, dtype=_F32), indexing="ij")
    ys, xs = ys.reshape(-1, 1), xs.reshape(-1, 1)                     # [N, 1]
    freqs = (2.0 ** jnp.arange(D // 4, dtype=_F32)).reshape(1, -1)    # [1, D/4]
    pe = jnp.concatenate(
        [jnp.sin(ys * freqs), jnp.cos(ys * freqs),
         jnp.sin(xs * freqs), jnp.cos(xs * freqs)], axis=-1)
    return pe.astype(_F32)                                            # [N, D]


def pack_slabs(params, pe):
    # Done once at init time: 2 packed slabs -> 2 parameter DMAs per launch.
    rb = jnp.arange(BN) // N_TOK
    qb = jnp.arange(BT) // T_Q
    derived = {
        "tok_tiled": jnp.tile(params["tokens"], (B, 1)),
        "pe_tiled": jnp.tile(pe, (B, 1)),
        "enc_mask": jnp.where(rb[:, None] == rb[None, :], 0.0, -1e9).astype(_F32),
        "dec_mask": jnp.where(qb[:, None] == rb[None, :], 0.0, -1e9).astype(_F32),
    }

    wslab = jnp.zeros((_W_ROWS, _W_LANES), _BF16)
    for name, rows, cols in _W_SPECS:
        r = _W_OFF[name][0]
        wslab = wslab.at[r:r + rows, 0:cols].set(params[name].astype(_BF16))

    fslab = jnp.zeros((_F_ROWS, _F_LANES), _F32)
    for name, rows, cols in _F_SPECS:
        r = _F_OFF[name][0]
        src = derived[name] if name in derived else params[name]
        fslab = fslab.at[r:r + rows, 0:cols].set(src.astype(_F32))

    return wslab, fslab


if __name__ == "__main__":
    key = jax.random.PRNGKey(0)
    k_x, k_p = jax.random.split(key)
    x = jax.random.normal(k_x, (B, C_IN, H, W), dtype=_F32)   # NCHW like PyTorch
    params = init_params(k_p)
    pe = get_dense_pe()
    wslab, fslab = pack_slabs(params, pe)                     # hoisted out of forward

    det_pred, mask = vitu_forward(x, wslab, fslab)
    jax.block_until_ready((det_pred, mask))

    assert det_pred.shape == (B, C_DET)
    assert mask.shape == (B, 1, HP, WP)
    assert bool(jnp.all(jnp.isfinite(det_pred))) and bool(jnp.all(jnp.isfinite(mask)))
    print("KERNEL_OK")
</pallas_src>

<mosaic_0001>
module attributes {stable_mosaic.version = 11 : i64} {
  func.func @vitu_kernel(%arg0: memref<32x64xbf16, #tpu.memory_space<vmem>>, %arg1: memref<480x64xbf16, #tpu.memory_space<vmem>>, %arg2: memref<248x64xf32, #tpu.memory_space<vmem>>, %arg3: memref<16x128xf32, #tpu.memory_space<vmem>>) attributes {dimension_semantics = [], scalar_prefetch = 0 : i64, scratch_operands = 0 : i64, tpu.core_type = #tpu.core_type<tc>} {
    %c0 = arith.constant 0 : index
    %c0_0 = arith.constant 0 : index
    %0 = vector.load %arg0[%c0, %c0_0] : memref<32x64xbf16, #tpu.memory_space<vmem>>, vector<32x64xbf16>
    %c0_1 = arith.constant 0 : index
    %c0_2 = arith.constant 0 : index
    %1 = vector.load %arg1[%c0_1, %c0_2] : memref<480x64xbf16, #tpu.memory_space<vmem>>, vector<64x32xbf16>
    %cst = arith.constant dense<0.000000e+00> : vector<32x32xf32>
    %2 = tpu.matmul %0, %1, %cst {dimension_numbers = #tpu.dot_dimension_numbers<[1], [0], [0], [1], [0, 0, 1, 1], [], []>} : vector<32x64xbf16>, vector<64x32xbf16>, vector<32x32xf32> -> vector<32x32xf32>
    %c96 = arith.constant 96 : index
    %c0_3 = arith.constant 0 : index
    %3 = vector.load %arg2[%c96, %c0_3] : memref<248x64xf32, #tpu.memory_space<vmem>>, vector<1x32xf32>
    %4 = vector.broadcast %3 : vector<1x32xf32> to vector<32x32xf32>
    %5 = arith.addf %2, %4 : vector<32x32xf32>
    %c104 = arith.constant 104 : index
    %c0_4 = arith.constant 0 : index
    %6 = vector.load %arg2[%c104, %c0_4] : memref<248x64xf32, #tpu.memory_space<vmem>>, vector<1x32xf32>
    %c112 = arith.constant 112 : index
    %c0_5 = arith.constant 0 : index
    %7 = vector.load %arg2[%c112, %c0_5] : memref<248x64xf32, #tpu.memory_space<vmem>>, vector<1x32xf32>
    %cst_6 = arith.constant dense<0.000000e+00> : vector<32xf32>
    %8 = vector.multi_reduction <add>, %5, %cst_6 [1] : vector<32x32xf32> to vector<32xf32>
    %9 = vector.shape_cast %8 : vector<32xf32> to vector<32x1xf32>
    %cst_7 = arith.constant 3.200000e+01 : f32
    %10 = vector.broadcast %cst_7 : f32 to vector<32x1xf32>
    %11 = arith.divf %9, %10 : vector<32x1xf32>
    %12 = vector.broadcast %11 : vector<32x1xf32> to vector<32x32xf32>
    %13 = arith.subf %5, %12 : vector<32x32xf32>
    %14 = vector.broadcast %11 : vector<32x1xf32> to vector<32x32xf32>
    %15 = arith.subf %5, %14 : vector<32x32xf32>
    %16 = arith.mulf %13, %15 : vector<32x32xf32>
    %cst_8 = arith.constant dense<0.000000e+00> : vector<32xf32>
    %17 = vector.multi_reduction <add>, %16, %cst_8 [1] : vector<32x32xf32> to vector<32xf32>
    %18 = vector.shape_cast %17 : vector<32xf32> to vector<32x1xf32>
    %cst_9 = arith.constant 3.200000e+01 : f32
    %19 = vector.broadcast %cst_9 : f32 to vector<32x1xf32>
    %20 = arith.divf %18, %19 : vector<32x1xf32>
    %21 = vector.broadcast %11 : vector<32x1xf32> to vector<32x32xf32>
    %22 = arith.subf %5, %21 : vector<32x32xf32>
    %cst_10 = arith.constant 9.99999997E-7 : f32
    %23 = vector.broadcast %cst_10 : f32 to vector<32x1xf32>
    %24 = arith.addf %20, %23 : vector<32x1xf32>
    %25 = math.rsqrt %24 : vector<32x1xf32>
    %26 = vector.broadcast %25 : vector<32x1xf32> to vector<32x32xf32>
    %27 = arith.mulf %22, %26 : vector<32x32xf32>
    %28 = vector.broadcast %6 : vector<1x32xf32> to vector<32x32xf32>
    %29 = arith.mulf %27, %28 : vector<32x32xf32>
    %30 = vector.broadcast %7 : vector<1x32xf32> to vector<32x32xf32>
    %31 = arith.addf %29, %30 : vector<32x32xf32>
    %32 = arith.truncf %31 : vector<32x32xf32> to vector<32x32xbf16>
    %c64 = arith.constant 64 : index
    %c0_11 = arith.constant 0 : index
    %33 = vector.load %arg1[%c64, %c0_11] : memref<480x64xbf16, #tpu.memory_space<vmem>>, vector<32x32xbf16>
    %cst_12 = arith.constant dense<0.000000e+00> : vector<32x32xf32>
    %34 = tpu.matmul %32, %33, %cst_12 {dimension_numbers = #tpu.dot_dimension_numbers<[1], [0], [0], [1], [0, 0, 1, 1], [], []>} : vector<32x32xbf16>, vector<32x32xbf16>, vector<32x32xf32> -> vector<32x32xf32>
    %c120 = arith.constant 120 : index
    %c0_13 = arith.constant 0 : index
    %35 = vector.load %arg2[%c120, %c0_13] : memref<248x64xf32, #tpu.memory_space<vmem>>, vector<1x32xf32>
    %36 = vector.broadcast %35 : vector<1x32xf32> to vector<32x32xf32>
    %37 = arith.addf %34, %36 : vector<32x32xf32>
    %c96_14 = arith.constant 96 : index
    %c0_15 = arith.constant 0 : index
    %38 = vector.load %arg1[%c96_14, %c0_15] : memref<480x64xbf16, #tpu.memory_space<vmem>>, vector<32x32xbf16>
    %cst_16 = arith.constant dense<0.000000e+00> : vector<32x32xf32>
    %39 = tpu.matmul %32, %38, %cst_16 {dimension_numbers = #tpu.dot_dimension_numbers<[1], [0], [0], [1], [0, 0, 1, 1], [], []>} : vector<32x32xbf16>, vector<32x32xbf16>, vector<32x32xf32> -> vector<32x32xf32>
    %c128 = arith.constant 128 : index
    %c0_17 = arith.constant 0 : index
    %40 = vector.load %arg2[%c128, %c0_17] : memref<248x64xf32, #tpu.memory_space<vmem>>, vector<1x32xf32>
    %41 = vector.broadcast %40 : vector<1x32xf32> to vector<32x32xf32>
    %42 = arith.addf %39, %41 : vector<32x32xf32>
    %c128_18 = arith.constant 128 : index
    %c0_19 = arith.constant 0 : index
    %43 = vector.load %arg1[%c128_18, %c0_19] : memref<480x64xbf16, #tpu.memory_space<vmem>>, vector<32x32xbf16>
    %cst_20 = arith.constant dense<0.000000e+00> : vector<32x32xf32>
    %44 = tpu.matmul %32, %43, %cst_20 {dimension_numbers = #tpu.dot_dimension_numbers<[1], [0], [0], [1], [0, 0, 1, 1], [], []>} : vector<32x32xbf16>, vector<32x32xbf16>, vector<32x32xf32> -> vector<32x32xf32>
    %c136 = arith.constant 136 : index
    %c0_21 = arith.constant 0 : index
    %45 = vector.load %arg2[%c136, %c0_21] : memref<248x64xf32, #tpu.memory_space<vmem>>, vector<1x32xf32>
    %46 = vector.broadcast %45 : vector<1x32xf32> to vector<32x32xf32>
    %47 = arith.addf %44, %46 : vector<32x32xf32>
    %c48 = arith.constant 48 : index
    %c0_22 = arith.constant 0 : index
    %48 = vector.load %arg2[%c48, %c0_22] : memref<248x64xf32, #tpu.memory_space<vmem>>, vector<32x32xf32>
    %cst_23 = arith.constant 0.353553385 : f32
    %49 = vector.broadcast %cst_23 : f32 to vector<32x32xf32>
    %50 = arith.mulf %37, %49 : vector<32x32xf32>
    %51 = arith.truncf %50 : vector<32x32xf32> to vector<32x32xbf16>
    %52 = arith.truncf %42 : vector<32x32xf32> to vector<32x32xbf16>
    %53 = arith.truncf %47 : vector<32x32xf32> to vector<32x32xbf16>
    %54 = vector.extract_strided_slice %51 {offsets = [0, 0], sizes = [32, 8], strides = [1, 1]} : vector<32x32xbf16> to vector<32x8xbf16>
    %55 = vector.extract_strided_slice %52 {offsets = [0, 0], sizes = [32, 8], strides = [1, 1]} : vector<32x32xbf16> to vector<32x8xbf16>
    "tpu.trace_start"() <{level = 10 : i32, message = "nd,md->nm"}> : () -> ()
    %cst_24 = arith.constant dense<0.000000e+00> : vector<32x32xf32>
    %56 = tpu.matmul %54, %55, %cst_24 {dimension_numbers = #tpu.dot_dimension_numbers<[1], [1], [0], [0], [0, 0, 1, 0], [], []>} : vector<32x8xbf16>, vector<32x8xbf16>, vector<32x32xf32> -> vector<32x32xf32>
    "tpu.trace_stop"() : () -> ()
    %57 = arith.addf %56, %48 : vector<32x32xf32>
    %cst_25 = arith.constant dense<0xFF800000> : vector<32xf32>
    %58 = vector.multi_reduction <maximumf>, %57, %cst_25 [1] : vector<32x32xf32> to vector<32xf32>
    %59 = vector.shape_cast %58 : vector<32xf32> to vector<32x1xf32>
    %60 = vector.broadcast %59 : vector<32x1xf32> to vector<32x32xf32>
    %61 = arith.subf %57, %60 : vector<32x32xf32>
    %62 = math.exp %61 : vector<32x32xf32>
    %cst_26 = arith.constant dense<0.000000e+00> : vector<32xf32>
    %63 = vector.multi_reduction <add>, %62, %cst_26 [1] : vector<32x32xf32> to vector<32xf32>
    %64 = vector.shape_cast %63 : vector<32xf32> to vector<32x1xf32>
    %65 = tpu.reciprocal %64 {approx = true} : vector<32x1xf32> -> vector<32x1xf32>
    %66 = vector.broadcast %65 : vector<32x1xf32> to vector<32x32xf32>
    %67 = arith.mulf %62, %66 : vector<32x32xf32>
    %68 = arith.truncf %67 : vector<32x32xf32> to vector<32x32xbf16>
    %69 = vector.extract_strided_slice %53 {offsets = [0, 0], sizes = [32, 8], strides = [1, 1]} : vector<32x32xbf16> to vector<32x8xbf16>
    %cst_27 = arith.constant dense<0.000000e+00> : vector<32x8xf32>
    %70 = tpu.matmul %68, %69, %cst_27 {dimension_numbers = #tpu.dot_dimension_numbers<[1], [0], [0], [1], [0, 0, 1, 1], [], []>} : vector<32x32xbf16>, vector<32x8xbf16>, vector<32x8xf32> -> vector<32x8xf32>
    %71 = vector.extract_strided_slice %51 {offsets = [0, 8], sizes = [32, 8], strides = [1, 1]} : vector<32x32xbf16> to vector<32x8xbf16>
    %72 = vector.extract_strided_slice %52 {offsets = [0, 8], sizes = [32, 8], strides = [1, 1]} : vector<32x32xbf16> to vector<32x8xbf16>
    "tpu.trace_start"() <{level = 10 : i32, message = "nd,md->nm"}> : () -> ()
    %cst_28 = arith.constant dense<0.000000e+00> : vector<32x32xf32>
    %73 = tpu.matmul %71, %72, %cst_28 {dimension_numbers = #tpu.dot_dimension_numbers<[1], [1], [0], [0], [0, 0, 1, 0], [], []>} : vector<32x8xbf16>, vector<32x8xbf16>, vector<32x32xf32> -> vector<32x32xf32>
    "tpu.trace_stop"() : () -> ()
    %74 = arith.addf %73, %48 : vector<32x32xf32>
    %cst_29 = arith.constant dense<0xFF800000> : vector<32xf32>
    %75 = vector.multi_reduction <maximumf>, %74, %cst_29 [1] : vector<32x32xf32> to vector<32xf32>
    %76 = vector.shape_cast %75 : vector<32xf32> to vector<32x1xf32>
    %77 = vector.broadcast %76 : vector<32x1xf32> to vector<32x32xf32>
    %78 = arith.subf %74, %77 : vector<32x32xf32>
    %79 = math.exp %78 : vector<32x32xf32>
    %cst_30 = arith.constant dense<0.000000e+00> : vector<32xf32>
    %80 = vector.multi_reduction <add>, %79, %cst_30 [1] : vector<32x32xf32> to vector<32xf32>
    %81 = vector.shape_cast %80 : vector<32xf32> to vector<32x1xf32>
    %82 = tpu.reciprocal %81 {approx = true} : vector<32x1xf32> -> vector<32x1xf32>
    %83 = vector.broadcast %82 : vector<32x1xf32> to vector<32x32xf32>
    %84 = arith.mulf %79, %83 : vector<32x32xf32>
    %85 = arith.truncf %84 : vector<32x32xf32> to vector<32x32xbf16>
    %86 = vector.extract_strided_slice %53 {offsets = [0, 8], sizes = [32, 8], strides = [1, 1]} : vector<32x32xbf16> to vector<32x8xbf16>
    %cst_31 = arith.constant dense<0.000000e+00> : vector<32x8xf32>
    %87 = tpu.matmul %85, %86, %cst_31 {dimension_numbers = #tpu.dot_dimension_numbers<[1], [0], [0], [1], [0, 0, 1, 1], [], []>} : vector<32x32xbf16>, vector<32x8xbf16>, vector<32x8xf32> -> vector<32x8xf32>
    %88 = vector.extract_strided_slice %51 {offsets = [0, 16], sizes = [32, 8], strides = [1, 1]} : vector<32x32xbf16> to vector<32x8xbf16>
    %89 = vector.extract_strided_slice %52 {offsets = [0, 16], sizes = [32, 8], strides = [1, 1]} : vector<32x32xbf16> to vector<32x8xbf16>
    "tpu.trace_start"() <{level = 10 : i32, message = "nd,md->nm"}> : () -> ()
    %cst_32 = arith.constant dense<0.000000e+00> : vector<32x32xf32>
    %90 = tpu.matmul %88, %89, %cst_32 {dimension_numbers = #tpu.dot_dimension_numbers<[1], [1], [0], [0], [0, 0, 1, 0], [], []>} : vector<32x8xbf16>, vector<32x8xbf16>, vector<32x32xf32> -> vector<32x32xf32>
    "tpu.trace_stop"() : () -> ()
    %91 = arith.addf %90, %48 : vector<32x32xf32>
    %cst_33 = arith.constant dense<0xFF800000> : vector<32xf32>
    %92 = vector.multi_reduction <maximumf>, %91, %cst_33 [1] : vector<32x32xf32> to vector<32xf32>
    %93 = vector.shape_cast %92 : vector<32xf32> to vector<32x1xf32>
    %94 = vector.broadcast %93 : vector<32x1xf32> to vector<32x32xf32>
    %95 = arith.subf %91, %94 : vector<32x32xf32>
    %96 = math.exp %95 : vector<32x32xf32>
    %cst_34 = arith.constant dense<0.000000e+00> : vector<32xf32>
    %97 = vector.multi_reduction <add>, %96, %cst_34 [1] : vector<32x32xf32> to vector<32xf32>
    %98 = vector.shape_cast %97 : vector<32xf32> to vector<32x1xf32>
    %99 = tpu.reciprocal %98 {approx = true} : vector<32x1xf32> -> vector<32x1xf32>
    %100 = vector.broadcast %99 : vector<32x1xf32> to vector<32x32xf32>
    %101 = arith.mulf %96, %100 : vector<32x32xf32>
    %102 = arith.truncf %101 : vector<32x32xf32> to vector<32x32xbf16>
    %103 = vector.extract_strided_slice %53 {offsets = [0, 16], sizes = [32, 8], strides = [1, 1]} : vector<32x32xbf16> to vector<32x8xbf16>
    %cst_35 = arith.constant dense<0.000000e+00> : vector<32x8xf32>
    %104 = tpu.matmul %102, %103, %cst_35 {dimension_numbers = #tpu.dot_dimension_numbers<[1], [0], [0], [1], [0, 0, 1, 1], [], []>} : vector<32x32xbf16>, vector<32x8xbf16>, vector<32x8xf32> -> vector<32x8xf32>
    %105 = vector.extract_strided_slice %51 {offsets = [0, 24], sizes = [32, 8], strides = [1, 1]} : vector<32x32xbf16> to vector<32x8xbf16>
    %106 = vector.extract_strided_slice %52 {offsets = [0, 24], sizes = [32, 8], strides = [1, 1]} : vector<32x32xbf16> to vector<32x8xbf16>
    "tpu.trace_start"() <{level = 10 : i32, message = "nd,md->nm"}> : () -> ()
    %cst_36 = arith.constant dense<0.000000e+00> : vector<32x32xf32>
    %107 = tpu.matmul %105, %106, %cst_36 {dimension_numbers = #tpu.dot_dimension_numbers<[1], [1], [0], [0], [0, 0, 1, 0], [], []>} : vector<32x8xbf16>, vector<32x8xbf16>, vector<32x32xf32> -> vector<32x32xf32>
    "tpu.trace_stop"() : () -> ()
    %108 = arith.addf %107, %48 : vector<32x32xf32>
    %cst_37 = arith.constant dense<0xFF800000> : vector<32xf32>
    %109 = vector.multi_reduction <maximumf>, %108, %cst_37 [1] : vector<32x32xf32> to vector<32xf32>
    %110 = vector.shape_cast %109 : vector<32xf32> to vector<32x1xf32>
    %111 = vector.broadcast %110 : vector<32x1xf32> to vector<32x32xf32>
    %112 = arith.subf %108, %111 : vector<32x32xf32>
    %113 = math.exp %112 : vector<32x32xf32>
    %cst_38 = arith.constant dense<0.000000e+00> : vector<32xf32>
    %114 = vector.multi_reduction <add>, %113, %cst_38 [1] : vector<32x32xf32> to vector<32xf32>
    %115 = vector.shape_cast %114 : vector<32xf32> to vector<32x1xf32>
    %116 = tpu.reciprocal %115 {approx = true} : vector<32x1xf32> -> vector<32x1xf32>
    %117 = vector.broadcast %116 : vector<32x1xf32> to vector<32x32xf32>
    %118 = arith.mulf %113, %117 : vector<32x32xf32>
    %119 = arith.truncf %118 : vector<32x32xf32> to vector<32x32xbf16>
    %120 = vector.extract_strided_slice %53 {offsets = [0, 24], sizes = [32, 8], strides = [1, 1]} : vector<32x32xbf16> to vector<32x8xbf16>
    %cst_39 = arith.constant dense<0.000000e+00> : vector<32x8xf32>
    %121 = tpu.matmul %119, %120, %cst_39 {dimension_numbers = #tpu.dot_dimension_numbers<[1], [0], [0], [1], [0, 0, 1, 1], [], []>} : vector<32x32xbf16>, vector<32x8xbf16>, vector<32x8xf32> -> vector<32x8xf32>
    %122 = tpu.concatenate %70, %87, %104, %121 in 1 : vector<32x8xf32>, vector<32x8xf32>, vector<32x8xf32>, vector<32x8xf32> -> vector<32x32xf32>
    %c160 = arith.constant 160 : index
    %c0_40 = arith.constant 0 : index
    %123 = vector.load %arg1[%c160, %c0_40] : memref<480x64xbf16, #tpu.memory_space<vmem>>, vector<32x32xbf16>
    %124 = arith.truncf %122 : vector<32x32xf32> to vector<32x32xbf16>
    %cst_41 = arith.constant dense<0.000000e+00> : vector<32x32xf32>
    %125 = tpu.matmul %124, %123, %cst_41 {dimension_numbers = #tpu.dot_dimension_numbers<[1], [0], [0], [1], [0, 0, 1, 1], [], []>} : vector<32x32xbf16>, vector<32x32xbf16>, vector<32x32xf32> -> vector<32x32xf32>
    %126 = arith.addf %5, %125 : vector<32x32xf32>
    %c144 = arith.constant 144 : index
    %c0_42 = arith.constant 0 : index
    %127 = vector.load %arg2[%c144, %c0_42] : memref<248x64xf32, #tpu.memory_space<vmem>>, vector<1x32xf32>
    %128 = vector.broadcast %127 : vector<1x32xf32> to vector<32x32xf32>
    %129 = arith.addf %126, %128 : vector<32x32xf32>
    %c152 = arith.constant 152 : index
    %c0_43 = arith.constant 0 : index
    %130 = vector.load %arg2[%c152, %c0_43] : memref<248x64xf32, #tpu.memory_space<vmem>>, vector<1x32xf32>
    %c160_44 = arith.constant 160 : index
    %c0_45 = arith.constant 0 : index
    %131 = vector.load %arg2[%c160_44, %c0_45] : memref<248x64xf32, #tpu.memory_space<vmem>>, vector<1x32xf32>
    %cst_46 = arith.constant dense<0.000000e+00> : vector<32xf32>
    %132 = vector.multi_reduction <add>, %129, %cst_46 [1] : vector<32x32xf32> to vector<32xf32>
    %133 = vector.shape_cast %132 : vector<32xf32> to vector<32x1xf32>
    %cst_47 = arith.constant 3.200000e+01 : f32
    %134 = vector.broadcast %cst_47 : f32 to vector<32x1xf32>
    %135 = arith.divf %133, %134 : vector<32x1xf32>
    %136 = vector.broadcast %135 : vector<32x1xf32> to vector<32x32xf32>
    %137 = arith.subf %129, %136 : vector<32x32xf32>
    %138 = vector.broadcast %135 : vector<32x1xf32> to vector<32x32xf32>
    %139 = arith.subf %129, %138 : vector<32x32xf32>
    %140 = arith.mulf %137, %139 : vector<32x32xf32>
    %cst_48 = arith.constant dense<0.000000e+00> : vector<32xf32>
    %141 = vector.multi_reduction <add>, %140, %cst_48 [1] : vector<32x32xf32> to vector<32xf32>
    %142 = vector.shape_cast %141 : vector<32xf32> to vector<32x1xf32>
    %cst_49 = arith.constant 3.200000e+01 : f32
    %143 = vector.broadcast %cst_49 : f32 to vector<32x1xf32>
    %144 = arith.divf %142, %143 : vector<32x1xf32>
    %145 = vector.broadcast %135 : vector<32x1xf32> to vector<32x32xf32>
    %146 = arith.subf %129, %145 : vector<32x32xf32>
    %cst_50 = arith.constant 9.99999997E-7 : f32
    %147 = vector.broadcast %cst_50 : f32 to vector<32x1xf32>
    %148 = arith.addf %144, %147 : vector<32x1xf32>
    %149 = math.rsqrt %148 : vector<32x1xf32>
    %150 = vector.broadcast %149 : vector<32x1xf32> to vector<32x32xf32>
    %151 = arith.mulf %146, %150 : vector<32x32xf32>
    %152 = vector.broadcast %130 : vector<1x32xf32> to vector<32x32xf32>
    %153 = arith.mulf %151, %152 : vector<32x32xf32>
    %154 = vector.broadcast %131 : vector<1x32xf32> to vector<32x32xf32>
    %155 = arith.addf %153, %154 : vector<32x32xf32>
    %c192 = arith.constant 192 : index
    %c0_51 = arith.constant 0 : index
    %156 = vector.load %arg1[%c192, %c0_51] : memref<480x64xbf16, #tpu.memory_space<vmem>>, vector<32x64xbf16>
    %157 = arith.truncf %155 : vector<32x32xf32> to vector<32x32xbf16>
    %cst_52 = arith.constant dense<0.000000e+00> : vector<32x64xf32>
    %158 = tpu.matmul %157, %156, %cst_52 {dimension_numbers = #tpu.dot_dimension_numbers<[1], [0], [0], [1], [0, 0, 1, 1], [], []>} : vector<32x32xbf16>, vector<32x64xbf16>, vector<32x64xf32> -> vector<32x64xf32>
    %c168 = arith.constant 168 : index
    %c0_53 = arith.constant 0 : index
    %159 = vector.load %arg2[%c168, %c0_53] : memref<248x64xf32, #tpu.memory_space<vmem>>, vector<1x64xf32>
    %160 = vector.broadcast %159 : vector<1x64xf32> to vector<32x64xf32>
    %161 = arith.addf %158, %160 : vector<32x64xf32>
    %162 = arith.mulf %161, %161 : vector<32x64xf32>
    %163 = arith.mulf %161, %162 : vector<32x64xf32>
    %cst_54 = arith.constant 4.471500e-02 : f32
    %164 = vector.broadcast %cst_54 : f32 to vector<32x64xf32>
    %165 = arith.mulf %164, %163 : vector<32x64xf32>
    %166 = arith.addf %161, %165 : vector<32x64xf32>
    %cst_55 = arith.constant 0.797884583 : f32
    %167 = vector.broadcast %cst_55 : f32 to vector<32x64xf32>
    %168 = arith.mulf %167, %166 : vector<32x64xf32>
    %169 = math.tanh %168 : vector<32x64xf32>
    %cst_56 = arith.constant 1.000000e+00 : f32
    %170 = vector.broadcast %cst_56 : f32 to vector<32x64xf32>
    %171 = arith.addf %170, %169 : vector<32x64xf32>
    %cst_57 = arith.constant 5.000000e-01 : f32
    %172 = vector.broadcast %cst_57 : f32 to vector<32x64xf32>
    %173 = arith.mulf %172, %171 : vector<32x64xf32>
    %174 = arith.mulf %161, %173 : vector<32x64xf32>
    %c224 = arith.constant 224 : index
    %c0_58 = arith.constant 0 : index
    %175 = vector.load %arg1[%c224, %c0_58] : memref<480x64xbf16, #tpu.memory_space<vmem>>, vector<64x32xbf16>
    %176 = arith.truncf %174 : vector<32x64xf32> to vector<32x64xbf16>
    %cst_59 = arith.constant dense<0.000000e+00> : vector<32x32xf32>
    %177 = tpu.matmul %176, %175, %cst_59 {dimension_numbers = #tpu.dot_dimension_numbers<[1], [0], [0], [1], [0, 0, 1, 1], [], []>} : vector<32x64xbf16>, vector<64x32xbf16>, vector<32x32xf32> -> vector<32x32xf32>
    %c176 = arith.constant 176 : index
    %c0_60 = arith.constant 0 : index
    %178 = vector.load %arg2[%c176, %c0_60] : memref<248x64xf32, #tpu.memory_space<vmem>>, vector<1x32xf32>
    %179 = vector.broadcast %178 : vector<1x32xf32> to vector<32x32xf32>
    %180 = arith.addf %177, %179 : vector<32x32xf32>
    %181 = arith.addf %129, %180 : vector<32x32xf32>
    %c16 = arith.constant 16 : index
    %c0_61 = arith.constant 0 : index
    %182 = vector.load %arg2[%c16, %c0_61] : memref<248x64xf32, #tpu.memory_space<vmem>>, vector<32x32xf32>
    %183 = arith.addf %181, %182 : vector<32x32xf32>
    %c0_62 = arith.constant 0 : index
    %c0_63 = arith.constant 0 : index
    %184 = vector.load %arg2[%c0_62, %c0_63] : memref<248x64xf32, #tpu.memory_space<vmem>>, vector<16x32xf32>
    %c288 = arith.constant 288 : index
    %c0_64 = arith.constant 0 : index
    %185 = vector.load %arg1[%c288, %c0_64] : memref<480x64xbf16, #tpu.memory_space<vmem>>, vector<32x32xbf16>
    %186 = arith.truncf %184 : vector<16x32xf32> to vector<16x32xbf16>
    %cst_65 = arith.constant dense<0.000000e+00> : vector<16x32xf32>
    %187 = tpu.matmul %186, %185, %cst_65 {dimension_numbers = #tpu.dot_dimension_numbers<[1], [0], [0], [1], [0, 0, 1, 1], [], []>} : vector<16x32xbf16>, vector<32x32xbf16>, vector<16x32xf32> -> vector<16x32xf32>
    %c184 = arith.constant 184 : index
    %c0_66 = arith.constant 0 : index
    %188 = vector.load %arg2[%c184, %c0_66] : memref<248x64xf32, #tpu.memory_space<vmem>>, vector<1x32xf32>
    %189 = vector.broadcast %188 : vector<1x32xf32> to vector<16x32xf32>
    %190 = arith.addf %187, %189 : vector<16x32xf32>
    %c320 = arith.constant 320 : index
    %c0_67 = arith.constant 0 : index
    %191 = vector.load %arg1[%c320, %c0_67] : memref<480x64xbf16, #tpu.memory_space<vmem>>, vector<32x32xbf16>
    %192 = arith.truncf %183 : vector<32x32xf32> to vector<32x32xbf16>
    %cst_68 = arith.constant dense<0.000000e+00> : vector<32x32xf32>
    %193 = tpu.matmul %192, %191, %cst_68 {dimension_numbers = #tpu.dot_dimension_numbers<[1], [0], [0], [1], [0, 0, 1, 1], [], []>} : vector<32x32xbf16>, vector<32x32xbf16>, vector<32x32xf32> -> vector<32x32xf32>
    %c192_69 = arith.constant 192 : index
    %c0_70 = arith.constant 0 : index
    %194 = vector.load %arg2[%c192_69, %c0_70] : memref<248x64xf32, #tpu.memory_space<vmem>>, vector<1x32xf32>
    %195 = vector.broadcast %194 : vector<1x32xf32> to vector<32x32xf32>
    %196 = arith.addf %193, %195 : vector<32x32xf32>
    %c352 = arith.constant 352 : index
    %c0_71 = arith.constant 0 : index
    %197 = vector.load %arg1[%c352, %c0_71] : memref<480x64xbf16, #tpu.memory_space<vmem>>, vector<32x32xbf16>
    %198 = arith.truncf %181 : vector<32x32xf32> to vector<32x32xbf16>
    %cst_72 = arith.constant dense<0.000000e+00> : vector<32x32xf32>
    %199 = tpu.matmul %198, %197, %cst_72 {dimension_numbers = #tpu.dot_dimension_numbers<[1], [0], [0], [1], [0, 0, 1, 1], [], []>} : vector<32x32xbf16>, vector<32x32xbf16>, vector<32x32xf32> -> vector<32x32xf32>
    %c200 = arith.constant 200 : index
    %c0_73 = arith.constant 0 : index
    %200 = vector.load %arg2[%c200, %c0_73] : memref<248x64xf32, #tpu.memory_space<vmem>>, vector<1x32xf32>
    %201 = vector.broadcast %200 : vector<1x32xf32> to vector<32x32xf32>
    %202 = arith.addf %199, %201 : vector<32x32xf32>
    %cst_74 = arith.constant 0.176776692 : f32
    %203 = vector.broadcast %cst_74 : f32 to vector<16x32xf32>
    %204 = arith.mulf %190, %203 : vector<16x32xf32>
    %205 = arith.truncf %204 : vector<16x32xf32> to vector<16x32xbf16>
    %206 = arith.truncf %196 : vector<32x32xf32> to vector<32x32xbf16>
    "tpu.trace_start"() <{level = 10 : i32, message = "td,nd->tn"}> : () -> ()
    %cst_75 = arith.constant dense<0.000000e+00> : vector<16x32xf32>
    %207 = tpu.matmul %205, %206, %cst_75 {dimension_numbers = #tpu.dot_dimension_numbers<[1], [1], [0], [0], [0, 0, 1, 0], [], []>} : vector<16x32xbf16>, vector<32x32xbf16>, vector<16x32xf32> -> vector<16x32xf32>
    "tpu.trace_stop"() : () -> ()
    %c80 = arith.constant 80 : index
    %c0_76 = arith.constant 0 : index
    %208 = vector.load %arg2[%c80, %c0_76] : memref<248x64xf32, #tpu.memory_space<vmem>>, vector<16x32xf32>
    %209 = arith.addf %207, %208 : vector<16x32xf32>
    %cst_77 = arith.constant dense<0xFF800000> : vector<16xf32>
    %210 = vector.multi_reduction <maximumf>, %209, %cst_77 [1] : vector<16x32xf32> to vector<16xf32>
    %211 = vector.shape_cast %210 : vector<16xf32> to vector<16x1xf32>
    %212 = vector.broadcast %211 : vector<16x1xf32> to vector<16x32xf32>
    %213 = arith.subf %209, %212 : vector<16x32xf32>
    %214 = math.exp %213 : vector<16x32xf32>
    %cst_78 = arith.constant dense<0.000000e+00> : vector<16xf32>
    %215 = vector.multi_reduction <add>, %214, %cst_78 [1] : vector<16x32xf32> to vector<16xf32>
    %216 = vector.shape_cast %215 : vector<16xf32> to vector<16x1xf32>
    %217 = tpu.reciprocal %216 {approx = true} : vector<16x1xf32> -> vector<16x1xf32>
    %218 = vector.broadcast %217 : vector<16x1xf32> to vector<16x32xf32>
    %219 = arith.mulf %214, %218 : vector<16x32xf32>
    %220 = arith.truncf %219 : vector<16x32xf32> to vector<16x32xbf16>
    %221 = arith.truncf %202 : vector<32x32xf32> to vector<32x32xbf16>
    %cst_79 = arith.constant dense<0.000000e+00> : vector<16x32xf32>
    %222 = tpu.matmul %220, %221, %cst_79 {dimension_numbers = #tpu.dot_dimension_numbers<[1], [0], [0], [1], [0, 0, 1, 1], [], []>} : vector<16x32xbf16>, vector<32x32xbf16>, vector<16x32xf32> -> vector<16x32xf32>
    %c384 = arith.constant 384 : index
    %c0_80 = arith.constant 0 : index
    %223 = vector.load %arg1[%c384, %c0_80] : memref<480x64xbf16, #tpu.memory_space<vmem>>, vector<32x32xbf16>
    %224 = arith.truncf %222 : vector<16x32xf32> to vector<16x32xbf16>
    %cst_81 = arith.constant dense<0.000000e+00> : vector<16x32xf32>
    %225 = tpu.matmul %224, %223, %cst_81 {dimension_numbers = #tpu.dot_dimension_numbers<[1], [0], [0], [1], [0, 0, 1, 1], [], []>} : vector<16x32xbf16>, vector<32x32xbf16>, vector<16x32xf32> -> vector<16x32xf32>
    %226 = arith.addf %184, %225 : vector<16x32xf32>
    %c208 = arith.constant 208 : index
    %c0_82 = arith.constant 0 : index
    %227 = vector.load %arg2[%c208, %c0_82] : memref<248x64xf32, #tpu.memory_space<vmem>>, vector<1x32xf32>
    %228 = vector.broadcast %227 : vector<1x32xf32> to vector<16x32xf32>
    %229 = arith.addf %226, %228 : vector<16x32xf32>
    %c216 = arith.constant 216 : index
    %c0_83 = arith.constant 0 : index
    %230 = vector.load %arg2[%c216, %c0_83] : memref<248x64xf32, #tpu.memory_space<vmem>>, vector<1x32xf32>
    %c224_84 = arith.constant 224 : index
    %c0_85 = arith.constant 0 : index
    %231 = vector.load %arg2[%c224_84, %c0_85] : memref<248x64xf32, #tpu.memory_space<vmem>>, vector<1x32xf32>
    %cst_86 = arith.constant dense<0.000000e+00> : vector<16xf32>
    %232 = vector.multi_reduction <add>, %229, %cst_86 [1] : vector<16x32xf32> to vector<16xf32>
    %233 = vector.shape_cast %232 : vector<16xf32> to vector<16x1xf32>
    %cst_87 = arith.constant 3.200000e+01 : f32
    %234 = vector.broadcast %cst_87 : f32 to vector<16x1xf32>
    %235 = arith.divf %233, %234 : vector<16x1xf32>
    %236 = vector.broadcast %235 : vector<16x1xf32> to vector<16x32xf32>
    %237 = arith.subf %229, %236 : vector<16x32xf32>
    %238 = vector.broadcast %235 : vector<16x1xf32> to vector<16x32xf32>
    %239 = arith.subf %229, %238 : vector<16x32xf32>
    %240 = arith.mulf %237, %239 : vector<16x32xf32>
    %cst_88 = arith.constant dense<0.000000e+00> : vector<16xf32>
    %241 = vector.multi_reduction <add>, %240, %cst_88 [1] : vector<16x32xf32> to vector<16xf32>
    %242 = vector.shape_cast %241 : vector<16xf32> to vector<16x1xf32>
    %cst_89 = arith.constant 3.200000e+01 : f32
    %243 = vector.broadcast %cst_89 : f32 to vector<16x1xf32>
    %244 = arith.divf %242, %243 : vector<16x1xf32>
    %245 = vector.broadcast %235 : vector<16x1xf32> to vector<16x32xf32>
    %246 = arith.subf %229, %245 : vector<16x32xf32>
    %cst_90 = arith.constant 9.99999997E-7 : f32
    %247 = vector.broadcast %cst_90 : f32 to vector<16x1xf32>
    %248 = arith.addf %244, %247 : vector<16x1xf32>
    %249 = math.rsqrt %248 : vector<16x1xf32>
    %250 = vector.broadcast %249 : vector<16x1xf32> to vector<16x32xf32>
    %251 = arith.mulf %246, %250 : vector<16x32xf32>
    %252 = vector.broadcast %230 : vector<1x32xf32> to vector<16x32xf32>
    %253 = arith.mulf %251, %252 : vector<16x32xf32>
    %254 = vector.broadcast %231 : vector<1x32xf32> to vector<16x32xf32>
    %255 = arith.addf %253, %254 : vector<16x32xf32>
    %256 = arith.truncf %255 : vector<16x32xf32> to vector<16x32xbf16>
    %c416 = arith.constant 416 : index
    %c0_91 = arith.constant 0 : index
    %257 = vector.load %arg1[%c416, %c0_91] : memref<480x64xbf16, #tpu.memory_space<vmem>>, vector<32x4xbf16>
    %cst_92 = arith.constant dense<0.000000e+00> : vector<16x4xf32>
    %258 = tpu.matmul %256, %257, %cst_92 {dimension_numbers = #tpu.dot_dimension_numbers<[1], [0], [0], [1], [0, 0, 1, 1], [], []>} : vector<16x32xbf16>, vector<32x4xbf16>, vector<16x4xf32> -> vector<16x4xf32>
    %c232 = arith.constant 232 : index
    %c0_93 = arith.constant 0 : index
    %259 = vector.load %arg2[%c232, %c0_93] : memref<248x64xf32, #tpu.memory_space<vmem>>, vector<1x4xf32>
    %260 = vector.broadcast %259 : vector<1x4xf32> to vector<16x4xf32>
    %261 = arith.addf %258, %260 : vector<16x4xf32>
    %c448 = arith.constant 448 : index
    %c0_94 = arith.constant 0 : index
    %262 = vector.load %arg1[%c448, %c0_94] : memref<480x64xbf16, #tpu.memory_space<vmem>>, vector<32x32xbf16>
    %cst_95 = arith.constant dense<0.000000e+00> : vector<16x32xf32>
    %263 = tpu.matmul %256, %262, %cst_95 {dimension_numbers = #tpu.dot_dimension_numbers<[1], [0], [0], [1], [0, 0, 1, 1], [], []>} : vector<16x32xbf16>, vector<32x32xbf16>, vector<16x32xf32> -> vector<16x32xf32>
    %c240 = arith.constant 240 : index
    %c0_96 = arith.constant 0 : index
    %264 = vector.load %arg2[%c240, %c0_96] : memref<248x64xf32, #tpu.memory_space<vmem>>, vector<1x32xf32>
    %265 = vector.broadcast %264 : vector<1x32xf32> to vector<16x32xf32>
    %266 = arith.addf %263, %265 : vector<16x32xf32>
    %267 = arith.truncf %266 : vector<16x32xf32> to vector<16x32xbf16>
    %268 = arith.truncf %183 : vector<32x32xf32> to vector<32x32xbf16>
    "tpu.trace_start"() <{level = 10 : i32, message = "td,nd->tn"}> : () -> ()
    %cst_97 = arith.constant dense<0.000000e+00> : vector<16x32xf32>
    %269 = tpu.matmul %267, %268, %cst_97 {dimension_numbers = #tpu.dot_dimension_numbers<[1], [1], [0], [0], [0, 0, 1, 0], [], []>} : vector<16x32xbf16>, vector<32x32xbf16>, vector<16x32xf32> -> vector<16x32xf32>
    %cst_98 = arith.constant 0.000000e+00 : f32
    "tpu.trace_stop"() : () -> ()
    %270 = vector.broadcast %cst_98 : f32 to vector<16x92xf32>
    %271 = tpu.concatenate %261, %269, %270 in 1 : vector<16x4xf32>, vector<16x32xf32>, vector<16x92xf32> -> vector<16x128xf32>
    %c0_99 = arith.constant 0 : index
    %c0_100 = arith.constant 0 : index
    %272 = vector.load %arg3[%c0_99, %c0_100] : memref<16x128xf32, #tpu.memory_space<vmem>>, vector<16x128xf32>
    tpu.vector_store %arg3[%c0_99, %c0_100], %271 {strides = array<i32>} : memref<16x128xf32, #tpu.memory_space<vmem>>, vector<16x128xf32>,
    return
  }
}

</mosaic_0001>

<llo_original>
// kernel: vitu_forward.1
$region0: #{vitu_forward.1}
  #allocation0 [shape = 'u32[]', space=smem, size = 0x4, offset = 0x4, fixed_abs, tag = 'smem constant byte address 0x4 - core index']
  #allocation1 [shape = 'u32[144,128]{1,0:T(1,128)}', space=vmem, size = 0x12000, scoped, tag = 'internal scratch']
  %s0 = inlined_call_operand.vmem [shape: bf16[32,64], index: 0, kind: input, shape index: {}]
  %s1 = inlined_call_operand.vmem [shape: bf16[480,64], index: 1, kind: input, shape index: {}]
  %s2 = inlined_call_operand.vmem [shape: f32[248,64], index: 2, kind: input, shape index: {}]
  %s3 = inlined_call_operand.vmem [shape: f32[16,128], index: 3, kind: output, shape index: {}]
  %s4 = sld [smem:[#allocation0]]
  $region22: #{vitu_forward.1} parent=0
    _
  %s6 = ssub.s32 1, %s4
  %s7 = scalar_select 0, %s6, %s4
  // Predicated region
  $region2: #{vitu_forward.1} parent=0 // pred_check
    _
  $region3: #{vitu_forward.1} parent=0 // pred_check_branch
    %9 = sbr.rel (0) target = $region5
  $region4: #{vitu_forward.1} parent=0 // pred_region
    _
  $region5: #{vitu_forward.1} parent=0 // pred_fallthru
    _
  // Predicated region
  $region6: #{vitu_forward.1} parent=0 // pred_check
    _
  $region7: #{vitu_forward.1} parent=0 // pred_check_branch
    %11 = sbr.rel (0) target = $region9
  $region8: #{vitu_forward.1} parent=0 // pred_region
    _
  $region9: #{vitu_forward.1} parent=0 // pred_fallthru
    _
  // Predicated region
  $region10: #{vitu_forward.1} parent=0 // pred_check
    _
  $region11: #{vitu_forward.1} parent=0 // pred_check_branch
    %13 = sbr.rel (0) target = $region13
  $region12: #{vitu_forward.1} parent=0 // pred_region
    _
  $region13: #{vitu_forward.1} parent=0 // pred_fallthru
    _
  %v15 = vld [vmem:[%s0] sm:$0xf]
  %v16 = vld [vmem:[%s0 + $0x4] sm:$0xf]
  %v17 = vld [vmem:[%s0 + $0x8] sm:$0xf]
  %v18 = vld [vmem:[%s0 + $0xc] sm:$0xf]
  %v19 = vld [vmem:[%s1] sm:$0xf]
  %v20 = vld [vmem:[%s1 + $0x4] sm:$0xf]
  %v21 = vld [vmem:[%s1 + $0x8] sm:$0xf]
  %v22 = vld [vmem:[%s1 + $0xc] sm:$0xf]
  %v23 = vld [vmem:[%s1 + $0x10] sm:$0xf]
  %v24 = vld [vmem:[%s1 + $0x14] sm:$0xf]
  %v25 = vld [vmem:[%s1 + $0x18] sm:$0xf]
  %v26 = vld [vmem:[%s1 + $0x1c] sm:$0xf]
  %v27 = vld [vmem:[%s2 + $0x60] sm:$0x1]
  %v28 = vlaneseq
  %v29 = vshrl.u32 %v28, 7
  %v30 = vsub.s32 0, %v29
  %v31 = vrot.slane %v27, %v30
  %v36 = vunpack.c.l.b16 %v15
  %v37 = vunpack.c.l.b16 %v16
  %v38 = vunpack.c.l.b16 %v17
  %v39 = vunpack.c.l.b16 %v18
  %v40 = vpack.c.b16 %v37, %v36
  %v41 = vpack.c.b16 %v39, %v38
  %v50 = vunpack.c.l.b16 %v19
  %v51 = vunpack.c.l.b16 %v20
  %v52 = vunpack.c.l.b16 %v21
  %v53 = vunpack.c.l.b16 %v22
  %v54 = vunpack.c.l.b16 %v23
  %v55 = vunpack.c.l.b16 %v24
  %v56 = vunpack.c.l.b16 %v25
  %v57 = vunpack.c.l.b16 %v26
  %v58 = vpack.c.b16 %v51, %v50
  %v59 = vpack.c.b16 %v53, %v52
  %v60 = vpack.c.b16 %v55, %v54
  %v61 = vpack.c.b16 %v57, %v56
  %vm66 = vcmask 523264
  %v68 = vsel %vm66, %v40, 0
  %v71 = vsel %vm66, %v41, 0
  %73 = vmatprep.subr.bf16.mxu0 0
  %74 = vmatpush1.bf16.msra.mxu0 %v58
  %75 = vmatprep.subr.bf16.mxu0 0
  %76 = vmatpush1.bf16.msra.mxu0 %v59
  %77 = vmatprep.subr.bf16.mxu0 0
  %78 = vmatpush1.bf16.msra.mxu0 %v60
  %79 = vmatprep.subr.bf16.mxu0 0
  %80 = vmatpush1.bf16.msra.mxu0 %v61
  %81 = vmatprep.subr.bf16.mxu0 0
  %82 = vmatpush1.bf16.msra.mxu0 0
  %83 = vmatprep.subr.bf16.mxu0 0
  %84 = vmatpush1.bf16.msra.mxu0 0
  %85 = vmatprep.subr.bf16.mxu0 0
  %86 = vmatpush1.bf16.msra.mxu0 0
  %87 = vmatprep.subr.bf16.mxu0 0
  %88 = vmatpush1.bf16.msra.mxu0 0
  %89 = vmatprep.subr.bf16.mxu0 0
  %90 = vmatpush1.bf16.msra.mxu0 0
  %91 = vmatprep.subr.bf16.mxu0 0
  %92 = vmatpush1.bf16.msra.mxu0 0
  %93 = vmatprep.subr.bf16.mxu0 0
  %94 = vmatpush1.bf16.msra.mxu0 0
  %95 = vmatprep.subr.bf16.mxu0 0
  %96 = vmatpush1.bf16.msra.mxu0 0
  %97 = vmatprep.subr.bf16.mxu0 0
  %98 = vmatpush1.bf16.msra.mxu0 0
  %99 = vmatprep.subr.bf16.mxu0 0
  %100 = vmatpush1.bf16.msra.mxu0 0
  %101 = vmatprep.subr.bf16.mxu0 0
  %102 = vmatpush1.bf16.msra.mxu0 0
  %103 = vmatprep.subr.bf16.mxu0 0
  %104 = vmatpush1.bf16.msra.mxu0 0
  %105 = vmatprep.mubr.bf16.mxu0 0
  %106 = vmatmul.mubr.bf16.gmra.mrb[0].mxu0 %v68
  %v107 = vpop.f32.mrb[0].mxu0
  %v108 = vadd.f32 %v31, %v107
  %v109 = vpop.f32.mrb[0].mxu0
  %v110 = vpop.f32.mrb[0].mxu0
  %v111 = vadd.f32 %v31, %v110
  %v112 = vpop.f32.mrb[0].mxu0
  %113 = vmatprep.mubr.bf16.mxu0 0
  %114 = vmatmul.mubr.bf16.gmra.mrb[0].mxu0 %v71
  %v115 = vpop.f32.mrb[0].mxu0
  %v116 = vadd.f32 %v31, %v115
  %v117 = vpop.f32.mrb[0].mxu0
  %v118 = vpop.f32.mrb[0].mxu0
  %v119 = vadd.f32 %v31, %v118
  %v120 = vpop.f32.mrb[0].mxu0
  %121 = vdwg.mxu0
  %v122 = vld [vmem:[%s2 + $0x68] sm:$0x1]
  %v123 = vld [vmem:[%s2 + $0x70] sm:$0x1]
  %vm124 = vcmask 261120
  %v125 = vsel %vm124, %v108, 0.0
  %126 = vadd.xlane.f32.xlu0 %v125
  %v127 = vpop.xlane.xlu0 %126
  %v128 = vsel %vm124, %v111, 0.0
  %129 = vadd.xlane.f32.xlu0 %v128
  %v130 = vpop.xlane.xlu0 %129
  %v131 = vsel %vm124, %v116, 0.0
  %132 = vadd.xlane.f32.xlu0 %v131
  %v133 = vpop.xlane.xlu0 %132
  %v134 = vsel %vm124, %v119, 0.0
  %135 = vadd.xlane.f32.xlu0 %v134
  %v136 = vpop.xlane.xlu0 %135
  %v137 = vrcp.pop 32.0
  %v138 = vmul.f32 %v127, %v137
  %v139 = vmul.f32 %v130, %v137
  %v140 = vmul.f32 %v133, %v137
  %v141 = vmul.f32 %v136, %v137
  %v142 = vsub.f32 %v108, %v138
  %v143 = vsub.f32 %v111, %v139
  %v144 = vsub.f32 %v116, %v140
  %v145 = vsub.f32 %v119, %v141
  %v146 = vmul.f32 %v142, %v142
  %v147 = vmul.f32 %v143, %v143
  %v148 = vmul.f32 %v144, %v144
  %v149 = vmul.f32 %v145, %v145
  %v150 = vsel %vm124, %v146, 0.0
  %151 = vadd.xlane.f32.xlu0 %v150
  %v152 = vpop.xlane.xlu0 %151
  %v153 = vsel %vm124, %v147, 0.0
  %154 = vadd.xlane.f32.xlu0 %v153
  %v155 = vpop.xlane.xlu0 %154
  %v156 = vsel %vm124, %v148, 0.0
  %157 = vadd.xlane.f32.xlu0 %v156
  %v158 = vpop.xlane.xlu0 %157
  %v159 = vsel %vm124, %v149, 0.0
  %160 = vadd.xlane.f32.xlu0 %v159
  %v161 = vpop.xlane.xlu0 %160
  %v162 = vmul.f32 %v152, %v137
  %v163 = vmul.f32 %v155, %v137
  %v164 = vmul.f32 %v158, %v137
  %v165 = vmul.f32 %v161, %v137
  %v166 = vadd.f32 %v162, 1e-06
  %v167 = vadd.f32 %v163, 1e-06
  %v168 = vadd.f32 %v164, 1e-06
  %v169 = vadd.f32 %v165, 1e-06
  %v170 = vrsqrt.pop %v166
  %v171 = vrsqrt.pop %v167
  %v172 = vrsqrt.pop %v168
  %v173 = vrsqrt.pop %v169
  %v174 = vmul.f32 %v142, %v170
  %v175 = vmul.f32 %v143, %v171
  %v176 = vmul.f32 %v144, %v172
  %v177 = vmul.f32 %v145, %v173
  %v178 = vlaneseq
  %v179 = vshrl.u32 %v178, 7
  %v180 = vsub.s32 0, %v179
  %v181 = vrot.slane %v122, %v180
  %v182 = vmul.f32 %v174, %v181
  %v183 = vmul.f32 %v175, %v181
  %v184 = vmul.f32 %v176, %v181
  %v185 = vmul.f32 %v177, %v181
  %v186 = vlaneseq
  %v187 = vshrl.u32 %v186, 7
  %v188 = vsub.s32 0, %v187
  %v189 = vrot.slane %v123, %v188
  %v190 = vadd.f32 %v182, %v189
  %v191 = vadd.f32 %v183, %v189
  %v192 = vadd.f32 %v184, %v189
  %v193 = vadd.f32 %v185, %v189
  %v194 = vpack.c.bf16 %v191, %v190
  %v195 = vpack.c.bf16 %v193, %v192
  %v196 = vld [vmem:[%s1 + $0x20] sm:$0xf]
  %v197 = vld [vmem:[%s1 + $0x24] sm:$0xf]
  %v198 = vld [vmem:[%s1 + $0x28] sm:$0xf]
  %v199 = vld [vmem:[%s1 + $0x2c] sm:$0xf]
  %v200 = vld [vmem:[%s2 + $0x78] sm:$0x1]
  %v201 = vlaneseq
  %v202 = vshrl.u32 %v201, 7
  %v203 = vsub.s32 0, %v202
  %v204 = vrot.slane %v200, %v203
  %v209 = vunpack.c.l.b16 %v196
  %v210 = vunpack.c.l.b16 %v197
  %v211 = vunpack.c.l.b16 %v198
  %v212 = vunpack.c.l.b16 %v199
  %v213 = vpack.c.b16 %v210, %v209
  %v214 = vpack.c.b16 %v212, %v211
  %v218 = vsel %vm124, %v194, 0
  %v221 = vsel %vm124, %v195, 0
  %223 = vmatprep.subr.bf16.mxu0 0
  %224 = vmatpush1.bf16.msra.mxu0 %v213
  %225 = vmatprep.subr.bf16.mxu0 0
  %226 = vmatpush1.bf16.msra.mxu0 %v214
  %227 = vmatprep.subr.bf16.mxu0 0
  %228 = vmatpush1.bf16.msra.mxu0 0
  %229 = vmatprep.subr.bf16.mxu0 0
  %230 = vmatpush1.bf16.msra.mxu0 0
  %231 = vmatprep.subr.bf16.mxu0 0
  %232 = vmatpush1.bf16.msra.mxu0 0
  %233 = vmatprep.subr.bf16.mxu0 0
  %234 = vmatpush1.bf16.msra.mxu0 0
  %235 = vmatprep.subr.bf16.mxu0 0
  %236 = vmatpush1.bf16.msra.mxu0 0
  %237 = vmatprep.subr.bf16.mxu0 0
  %238 = vmatpush1.bf16.msra.mxu0 0
  %239 = vmatprep.subr.bf16.mxu0 0
  %240 = vmatpush1.bf16.msra.mxu0 0
  %241 = vmatprep.subr.bf16.mxu0 0
  %242 = vmatpush1.bf16.msra.mxu0 0
  %243 = vmatprep.subr.bf16.mxu0 0
  %244 = vmatpush1.bf16.msra.mxu0 0
  %245 = vmatprep.subr.bf16.mxu0 0
  %246 = vmatpush1.bf16.msra.mxu0 0
  %247 = vmatprep.subr.bf16.mxu0 0
  %248 = vmatpush1.bf16.msra.mxu0 0
  %249 = vmatprep.subr.bf16.mxu0 0
  %250 = vmatpush1.bf16.msra.mxu0 0
  %251 = vmatprep.subr.bf16.mxu0 0
  %252 = vmatpush1.bf16.msra.mxu0 0
  %253 = vmatprep.subr.bf16.mxu0 0
  %254 = vmatpush1.bf16.msra.mxu0 0
  %255 = vmatprep.mubr.bf16.mxu0 0
  %256 = vmatmul.mubr.bf16.gmra.mrb[0].mxu0 %v218
  %v257 = vpop.f32.mrb[0].mxu0
  %v258 = vadd.f32 %v204, %v257
  %v259 = vpop.f32.mrb[0].mxu0
  %v260 = vpop.f32.mrb[0].mxu0
  %v261 = vadd.f32 %v204, %v260
  %v262 = vpop.f32.mrb[0].mxu0
  %263 = vmatprep.mubr.bf16.mxu0 0
  %264 = vmatmul.mubr.bf16.gmra.mrb[0].mxu0 %v221
  %v265 = vpop.f32.mrb[0].mxu0
  %v266 = vadd.f32 %v204, %v265
  %v267 = vpop.f32.mrb[0].mxu0
  %v268 = vpop.f32.mrb[0].mxu0
  %v269 = vadd.f32 %v204, %v268
  %v270 = vpop.f32.mrb[0].mxu0
  %271 = vdwg.mxu0
  %v272 = vld [vmem:[%s1 + $0x30] sm:$0xf]
  %v273 = vld [vmem:[%s1 + $0x34] sm:$0xf]
  %v274 = vld [vmem:[%s1 + $0x38] sm:$0xf]
  %v275 = vld [vmem:[%s1 + $0x3c] sm:$0xf]
  %v276 = vld [vmem:[%s2 + $0x80] sm:$0x1]
  %v277 = vlaneseq
  %v278 = vshrl.u32 %v277, 7
  %v279 = vsub.s32 0, %v278
  %v280 = vrot.slane %v276, %v279
  %v285 = vunpack.c.l.b16 %v272
  %v286 = vunpack.c.l.b16 %v273
  %v287 = vunpack.c.l.b16 %v274
  %v288 = vunpack.c.l.b16 %v275
  %v289 = vpack.c.b16 %v286, %v285
  %v290 = vpack.c.b16 %v288, %v287
  %293 = vmatprep.subr.bf16.mxu0 0
  %294 = vmatpush1.bf16.msra.mxu0 %v289
  %295 = vmatprep.subr.bf16.mxu0 0
  %296 = vmatpush1.bf16.msra.mxu0 %v290
  %297 = vmatprep.subr.bf16.mxu0 0
  %298 = vmatpush1.bf16.msra.mxu0 0
  %299 = vmatprep.subr.bf16.mxu0 0
  %300 = vmatpush1.bf16.msra.mxu0 0
  %301 = vmatprep.subr.bf16.mxu0 0
  %302 = vmatpush1.bf16.msra.mxu0 0
  %303 = vmatprep.subr.bf16.mxu0 0
  %304 = vmatpush1.bf16.msra.mxu0 0
  %305 = vmatprep.subr.bf16.mxu0 0
  %306 = vmatpush1.bf16.msra.mxu0 0
  %307 = vmatprep.subr.bf16.mxu0 0
  %308 = vmatpush1.bf16.msra.mxu0 0
  %309 = vmatprep.subr.bf16.mxu0 0
  %310 = vmatpush1.bf16.msra.mxu0 0
  %311 = vmatprep.subr.bf16.mxu0 0
  %312 = vmatpush1.bf16.msra.mxu0 0
  %313 = vmatprep.subr.bf16.mxu0 0
  %314 = vmatpush1.bf16.msra.mxu0 0
  %315 = vmatprep.subr.bf16.mxu0 0
  %316 = vmatpush1.bf16.msra.mxu0 0
  %317 = vmatprep.subr.bf16.mxu0 0
  %318 = vmatpush1.bf16.msra.mxu0 0
  %319 = vmatprep.subr.bf16.mxu0 0
  %320 = vmatpush1.bf16.msra.mxu0 0
  %321 = vmatprep.subr.bf16.mxu0 0
  %322 = vmatpush1.bf16.msra.mxu0 0
  %323 = vmatprep.subr.bf16.mxu0 0
  %324 = vmatpush1.bf16.msra.mxu0 0
  %325 = vmatprep.mubr.bf16.mxu0 0
  %326 = vmatmul.mubr.bf16.gmra.mrb[0].mxu0 %v218
  %v327 = vpop.f32.mrb[0].mxu0
  %v328 = vadd.f32 %v280, %v327
  %v329 = vpop.f32.mrb[0].mxu0
  %v330 = vpop.f32.mrb[0].mxu0
  %v331 = vadd.f32 %v280, %v330
  %v332 = vpop.f32.mrb[0].mxu0
  %333 = vmatprep.mubr.bf16.mxu0 0
  %334 = vmatmul.mubr.bf16.gmra.mrb[0].mxu0 %v221
  %v335 = vpop.f32.mrb[0].mxu0
  %v336 = vadd.f32 %v280, %v335
  %v337 = vpop.f32.mrb[0].mxu0
  %v338 = vpop.f32.mrb[0].mxu0
  %v339 = vadd.f32 %v280, %v338
  %v340 = vpop.f32.mrb[0].mxu0
  %341 = vdwg.mxu0
  %v342 = vld [vmem:[%s1 + $0x40] sm:$0xf]
  %v343 = vld [vmem:[%s1 + $0x44] sm:$0xf]
  %v344 = vld [vmem:[%s1 + $0x48] sm:$0xf]
  %v345 = vld [vmem:[%s1 + $0x4c] sm:$0xf]
  %v346 = vld [vmem:[%s2 + $0x88] sm:$0x1]
  %v347 = vlaneseq
  %v348 = vshrl.u32 %v347, 7
  %v349 = vsub.s32 0, %v348
  %v350 = vrot.slane %v346, %v349
  %v355 = vunpack.c.l.b16 %v342
  %v356 = vunpack.c.l.b16 %v343
  %v357 = vunpack.c.l.b16 %v344
  %v358 = vunpack.c.l.b16 %v345
  %v359 = vpack.c.b16 %v356, %v355
  %v360 = vpack.c.b16 %v358, %v357
  %363 = vmatprep.subr.bf16.mxu0 0
  %364 = vmatpush1.bf16.msra.mxu0 %v359
  %365 = vmatprep.subr.bf16.mxu0 0
  %366 = vmatpush1.bf16.msra.mxu0 %v360
  %367 = vmatprep.subr.bf16.mxu0 0
  %368 = vmatpush1.bf16.msra.mxu0 0
  %369 = vmatprep.subr.bf16.mxu0 0
  %370 = vmatpush1.bf16.msra.mxu0 0
  %371 = vmatprep.subr.bf16.mxu0 0
  %372 = vmatpush1.bf16.msra.mxu0 0
  %373 = vmatprep.subr.bf16.mxu0 0
  %374 = vmatpush1.bf16.msra.mxu0 0
  %375 = vmatprep.subr.bf16.mxu0 0
  %376 = vmatpush1.bf16.msra.mxu0 0
  %377 = vmatprep.subr.bf16.mxu0 0
  %378 = vmatpush1.bf16.msra.mxu0 0
  %379 = vmatprep.subr.bf16.mxu0 0
  %380 = vmatpush1.bf16.msra.mxu0 0
  %381 = vmatprep.subr.bf16.mxu0 0
  %382 = vmatpush1.bf16.msra.mxu0 0
  %383 = vmatprep.subr.bf16.mxu0 0
  %384 = vmatpush1.bf16.msra.mxu0 0
  %385 = vmatprep.subr.bf16.mxu0 0
  %386 = vmatpush1.bf16.msra.mxu0 0
  %387 = vmatprep.subr.bf16.mxu0 0
  %388 = vmatpush1.bf16.msra.mxu0 0
  %389 = vmatprep.subr.bf16.mxu0 0
  %390 = vmatpush1.bf16.msra.mxu0 0
  %391 = vmatprep.subr.bf16.mxu0 0
  %392 = vmatpush1.bf16.msra.mxu0 0
  %393 = vmatprep.subr.bf16.mxu0 0
  %394 = vmatpush1.bf16.msra.mxu0 0
  %395 = vmatprep.mubr.bf16.mxu0 0
  %396 = vmatmul.mubr.bf16.gmra.mrb[0].mxu0 %v218
  %v397 = vpop.f32.mrb[0].mxu0
  %v398 = vadd.f32 %v350, %v397
  %v399 = vpop.f32.mrb[0].mxu0
  %v400 = vpop.f32.mrb[0].mxu0
  %v401 = vadd.f32 %v350, %v400
  %v402 = vpop.f32.mrb[0].mxu0
  %403 = vmatprep.mubr.bf16.mxu0 0
  %404 = vmatmul.mubr.bf16.gmra.mrb[0].mxu0 %v221
  %v405 = vpop.f32.mrb[0].mxu0
  %v406 = vadd.f32 %v350, %v405
  %v407 = vpop.f32.mrb[0].mxu0
  %v408 = vpop.f32.mrb[0].mxu0
  %v409 = vadd.f32 %v350, %v408
  %v410 = vpop.f32.mrb[0].mxu0
  %411 = vdwg.mxu0
  %v412 = vld [vmem:[%s2 + $0x30] sm:$0xff]
  %v413 = vld [vmem:[%s2 + $0x38] sm:$0xff]
  %v414 = vld [vmem:[%s2 + $0x40] sm:$0xff]
  %v415 = vld [vmem:[%s2 + $0x48] sm:$0xff]
  %v416 = vmul.f32 %v258, 0.35355338
  %v417 = vmul.f32 %v261, 0.35355338
  %v418 = vmul.f32 %v266, 0.35355338
  %v419 = vmul.f32 %v269, 0.35355338
  %v420 = vpack.c.bf16 %v417, %v416
  %v421 = vpack.c.bf16 %v419, %v418
  %v422 = vpack.c.bf16 %v331, %v328
  %v423 = vpack.c.bf16 %v339, %v336
  %v424 = vpack.c.bf16 %v401, %v398
  %v425 = vpack.c.bf16 %v409, %v406
  %vm426 = vcmask 64512
  %v428 = vsel %vm426, %v420, 0
  %v431 = vsel %vm426, %v421, 0
  %v434 = vsel %vm426, %v422, 0
  %v437 = vsel %vm426, %v423, 0
  %439 = vmatprep.subr.bf16.mxu0 0
  %440 = vmatpush1.bf16.xpose.msra.mxu0 %v434
  %441 = vmatprep.subr.bf16.mxu0 0
  %442 = vmatpush1.bf16.xpose.msra.mxu0 %v437
  %443 = vmatprep.subr.bf16.mxu0 0
  %444 = vmatpush1.bf16.xpose.msra.mxu0 0
  %445 = vmatprep.subr.bf16.mxu0 0
  %446 = vmatpush1.bf16.xpose.msra.mxu0 0
  %447 = vmatprep.subr.bf16.mxu0 0
  %448 = vmatpush1.bf16.xpose.msra.mxu0 0
  %449 = vmatprep.subr.bf16.mxu0 0
  %450 = vmatpush1.bf16.xpose.msra.mxu0 0
  %451 = vmatprep.subr.bf16.mxu0 0
  %452 = vmatpush1.bf16.xpose.msra.mxu0 0
  %453 = vmatprep.subr.bf16.mxu0 0
  %454 = vmatpush1.bf16.xpose.msra.mxu0 0
  %455 = vmatprep.subr.bf16.mxu0 0
  %456 = vmatpush1.bf16.xpose.msra.mxu0 0
  %457 = vmatprep.subr.bf16.mxu0 0
  %458 = vmatpush1.bf16.xpose.msra.mxu0 0
  %459 = vmatprep.subr.bf16.mxu0 0
  %460 = vmatpush1.bf16.xpose.msra.mxu0 0
  %461 = vmatprep.subr.bf16.mxu0 0
  %462 = vmatpush1.bf16.xpose.msra.mxu0 0
  %463 = vmatprep.subr.bf16.mxu0 0
  %464 = vmatpush1.bf16.xpose.msra.mxu0 0
  %465 = vmatprep.subr.bf16.mxu0 0
  %466 = vmatpush1.bf16.xpose.msra.mxu0 0
  %467 = vmatprep.subr.bf16.mxu0 0
  %468 = vmatpush1.bf16.xpose.msra.mxu0 0
  %469 = vmatprep.subr.bf16.mxu0 0
  %470 = vmatpush1.bf16.xpose.msra.mxu0 0
  %471 = vmatprep.mubr.bf16.mxu0 0
  %472 = vmatmul.mubr.bf16.gmra.mrb[0].mxu0 %v428
  %v473 = vpop.f32.mrb[0].mxu0
  %v474 = vadd.f32 %v412, %v473
  %v475 = vpop.f32.mrb[0].mxu0
  %v476 = vpop.f32.mrb[0].mxu0
  %v477 = vadd.f32 %v413, %v476
  %v478 = vpop.f32.mrb[0].mxu0
  %479 = vmatprep.mubr.bf16.mxu0 0
  %480 = vmatmul.mubr.bf16.gmra.mrb[0].mxu0 %v431
  %v481 = vpop.f32.mrb[0].mxu0
  %v482 = vadd.f32 %v414, %v481
  %v483 = vpop.f32.mrb[0].mxu0
  %v484 = vpop.f32.mrb[0].mxu0
  %v485 = vadd.f32 %v415, %v484
  %v486 = vpop.f32.mrb[0].mxu0
  %487 = vdwg.mxu0
  %v488 = vsel %vm124, %v474, -inf
  %489 = vmax.xlane.f32.xlu0 %v488
  %v490 = vpop.xlane.xlu0 %489
  %v491 = vsel %vm124, %v477, -inf
  %492 = vmax.xlane.f32.xlu0 %v491
  %v493 = vpop.xlane.xlu0 %492
  %v494 = vsel %vm124, %v482, -inf
  %495 = vmax.xlane.f32.xlu0 %v494
  %v496 = vpop.xlane.xlu0 %495
  %v497 = vsel %vm124, %v485, -inf
  %498 = vmax.xlane.f32.xlu0 %v497
  %v499 = vpop.xlane.xlu0 %498
  %v500 = vsub.f32 %v474, %v490
  %v501 = vsub.f32 %v477, %v493
  %v502 = vsub.f32 %v482, %v496
  %v503 = vsub.f32 %v485, %v499
  %v504 = vmul.f32 %v500, 1.442695
  %v505 = vpow.pop %v504
  %v506 = vmul.f32 %v501, 1.442695
  %v507 = vpow.pop %v506
  %v508 = vmul.f32 %v502, 1.442695
  %v509 = vpow.pop %v508
  %v510 = vmul.f32 %v503, 1.442695
  %v511 = vpow.pop %v510
  %v512 = vsel %vm124, %v505, 0.0
  %513 = vadd.xlane.f32.xlu0 %v512
  %v514 = vpop.xlane.xlu0 %513
  %v515 = vsel %vm124, %v507, 0.0
  %516 = vadd.xlane.f32.xlu0 %v515
  %v517 = vpop.xlane.xlu0 %516
  %v518 = vsel %vm124, %v509, 0.0
  %519 = vadd.xlane.f32.xlu0 %v518
  %v520 = vpop.xlane.xlu0 %519
  %v521 = vsel %vm124, %v511, 0.0
  %522 = vadd.xlane.f32.xlu0 %v521
  %v523 = vpop.xlane.xlu0 %522
  %v524 = vrcp.pop %v514
  %v525 = vrcp.pop %v517
  %v526 = vrcp.pop %v520
  %v527 = vrcp.pop %v523
  %v528 = vmul.f32 %v505, %v524
  %v529 = vmul.f32 %v507, %v525
  %v530 = vmul.f32 %v509, %v526
  %v531 = vmul.f32 %v511, %v527
  %v532 = vpack.c.bf16 %v529, %v528
  %v533 = vpack.c.bf16 %v531, %v530
  %v535 = vsel %vm124, %v532, 0
  %v538 = vsel %vm124, %v533, 0
  %540 = vmatprep.subr.bf16.mxu0 0
  %541 = vmatpush1.bf16.msra.mxu0 %v424
  %542 = vmatprep.subr.bf16.mxu0 0
  %543 = vmatpush1.bf16.msra.mxu0 %v425
  %544 = vmatprep.subr.bf16.mxu0 0
  %545 = vmatpush1.bf16.msra.mxu0 0
  %546 = vmatprep.subr.bf16.mxu0 0
  %547 = vmatpush1.bf16.msra.mxu0 0
  %548 = vmatprep.subr.bf16.mxu0 0
  %549 = vmatpush1.bf16.msra.mxu0 0
  %550 = vmatprep.subr.bf16.mxu0 0
  %551 = vmatpush1.bf16.msra.mxu0 0
  %552 = vmatprep.subr.bf16.mxu0 0
  %553 = vmatpush1.bf16.msra.mxu0 0
  %554 = vmatprep.subr.bf16.mxu0 0
  %555 = vmatpush1.bf16.msra.mxu0 0
  %556 = vmatprep.subr.bf16.mxu0 0
  %557 = vmatpush1.bf16.msra.mxu0 0
  %558 = vmatprep.subr.bf16.mxu0 0
  %559 = vmatpush1.bf16.msra.mxu0 0
  %560 = vmatprep.subr.bf16.mxu0 0
  %561 = vmatpush1.bf16.msra.mxu0 0
  %562 = vmatprep.subr.bf16.mxu0 0
  %563 = vmatpush1.bf16.msra.mxu0 0
  %564 = vmatprep.subr.bf16.mxu0 0
  %565 = vmatpush1.bf16.msra.mxu0 0
  %566 = vmatprep.subr.bf16.mxu0 0
  %567 = vmatpush1.bf16.msra.mxu0 0
  %568 = vmatprep.subr.bf16.mxu0 0
  %569 = vmatpush1.bf16.msra.mxu0 0
  %570 = vmatprep.subr.bf16.mxu0 0
  %571 = vmatpush1.bf16.msra.mxu0 0
  %572 = vmatprep.mubr.bf16.mxu0 0
  %573 = vmatmul.mubr.bf16.gmra.mrb[0].mxu0 %v535
  %v574 = vpop.f32.mrb[0].mxu0
  %v575 = vadd.f32 0.0, %v574
  %v576 = vpop.f32.mrb[0].mxu0
  %v577 = vpop.f32.mrb[0].mxu0
  %v578 = vadd.f32 0.0, %v577
  %v579 = vpop.f32.mrb[0].mxu0
  %580 = vmatprep.mubr.bf16.mxu0 0
  %581 = vmatmul.mubr.bf16.gmra.mrb[0].mxu0 %v538
  %v582 = vpop.f32.mrb[0].mxu0
  %v583 = vadd.f32 0.0, %v582
  %v584 = vpop.f32.mrb[0].mxu0
  %v585 = vpop.f32.mrb[0].mxu0
  %v586 = vadd.f32 0.0, %v585
  %v587 = vpop.f32.mrb[0].mxu0
  %588 = vdwg.mxu0
  %591 = vrot.lane.b32.xlu0 %v420, 120
  %v592 = vpop.permute.xlu0 %591
  %593 = vrot.lane.b32.xlu0 %v421, 120
  %v594 = vpop.permute.xlu0 %593
  %597 = vrot.lane.b32.xlu0 %v422, 120
  %v598 = vpop.permute.xlu0 %597
  %599 = vrot.lane.b32.xlu0 %v423, 120
  %v600 = vpop.permute.xlu0 %599
  %v602 = vsel %vm426, %v592, 0
  %v605 = vsel %vm426, %v594, 0
  %v608 = vsel %vm426, %v598, 0
  %v611 = vsel %vm426, %v600, 0
  %613 = vmatprep.subr.bf16.mxu0 0
  %614 = vmatpush1.bf16.xpose.msra.mxu0 %v608
  %615 = vmatprep.subr.bf16.mxu0 0
  %616 = vmatpush1.bf16.xpose.msra.mxu0 %v611
  %617 = vmatprep.subr.bf16.mxu0 0
  %618 = vmatpush1.bf16.xpose.msra.mxu0 0
  %619 = vmatprep.subr.bf16.mxu0 0
  %620 = vmatpush1.bf16.xpose.msra.mxu0 0
  %621 = vmatprep.subr.bf16.mxu0 0
  %622 = vmatpush1.bf16.xpose.msra.mxu0 0
  %623 = vmatprep.subr.bf16.mxu0 0
  %624 = vmatpush1.bf16.xpose.msra.mxu0 0
  %625 = vmatprep.subr.bf16.mxu0 0
  %626 = vmatpush1.bf16.xpose.msra.mxu0 0
  %627 = vmatprep.subr.bf16.mxu0 0
  %628 = vmatpush1.bf16.xpose.msra.mxu0 0
  %629 = vmatprep.subr.bf16.mxu0 0
  %630 = vmatpush1.bf16.xpose.msra.mxu0 0
  %631 = vmatprep.subr.bf16.mxu0 0
  %632 = vmatpush1.bf16.xpose.msra.mxu0 0
  %633 = vmatprep.subr.bf16.mxu0 0
  %634 = vmatpush1.bf16.xpose.msra.mxu0 0
  %635 = vmatprep.subr.bf16.mxu0 0
  %636 = vmatpush1.bf16.xpose.msra.mxu0 0
  %637 = vmatprep.subr.bf16.mxu0 0
  %638 = vmatpush1.bf16.xpose.msra.mxu0 0
  %639 = vmatprep.subr.bf16.mxu0 0
  %640 = vmatpush1.bf16.xpose.msra.mxu0 0
  %641 = vmatprep.subr.bf16.mxu0 0
  %642 = vmatpush1.bf16.xpose.msra.mxu0 0
  %643 = vmatprep.subr.bf16.mxu0 0
  %644 = vmatpush1.bf16.xpose.msra.mxu0 0
  %645 = vmatprep.mubr.bf16.mxu0 0
  %646 = vmatmul.mubr.bf16.gmra.mrb[0].mxu0 %v602
  %v647 = vpop.f32.mrb[0].mxu0
  %v648 = vadd.f32 %v412, %v647
  %v649 = vpop.f32.mrb[0].mxu0
  %v650 = vpop.f32.mrb[0].mxu0
  %v651 = vadd.f32 %v413, %v650
  %v652 = vpop.f32.mrb[0].mxu0
  %653 = vmatprep.mubr.bf16.mxu0 0
  %654 = vmatmul.mubr.bf16.gmra.mrb[0].mxu0 %v605
  %v655 = vpop.f32.mrb[0].mxu0
  %v656 = vadd.f32 %v414, %v655
  %v657 = vpop.f32.mrb[0].mxu0
  %v658 = vpop.f32.mrb[0].mxu0
  %v659 = vadd.f32 %v415, %v658
  %v660 = vpop.f32.mrb[0].mxu0
  %661 = vdwg.mxu0
  %v662 = vsel %vm124, %v648, -inf
  %663 = vmax.xlane.f32.xlu0 %v662
  %v664 = vpop.xlane.xlu0 %663
  %v665 = vsel %vm124, %v651, -inf
  %666 = vmax.xlane.f32.xlu0 %v665
  %v667 = vpop.xlane.xlu0 %666
  %v668 = vsel %vm124, %v656, -inf
  %669 = vmax.xlane.f32.xlu0 %v668
  %v670 = vpop.xlane.xlu0 %669
  %v671 = vsel %vm124, %v659, -inf
  %672 = vmax.xlane.f32.xlu0 %v671
  %v673 = vpop.xlane.xlu0 %672
  %v674 = vsub.f32 %v648, %v664
  %v675 = vsub.f32 %v651, %v667
  %v676 = vsub.f32 %v656, %v670
  %v677 = vsub.f32 %v659, %v673
  %v678 = vmul.f32 %v674, 1.442695
  %v679 = vpow.pop %v678
  %v680 = vmul.f32 %v675, 1.442695
  %v681 = vpow.pop %v680
  %v682 = vmul.f32 %v676, 1.442695
  %v683 = vpow.pop %v682
  %v684 = vmul.f32 %v677, 1.442695
  %v685 = vpow.pop %v684
  %v686 = vsel %vm124, %v679, 0.0
  %687 = vadd.xlane.f32.xlu0 %v686
  %v688 = vpop.xlane.xlu0 %687
  %v689 = vsel %vm124, %v681, 0.0
  %690 = vadd.xlane.f32.xlu0 %v689
  %v691 = vpop.xlane.xlu0 %690
  %v692 = vsel %vm124, %v683, 0.0
  %693 = vadd.xlane.f32.xlu0 %v692
  %v694 = vpop.xlane.xlu0 %693
  %v695 = vsel %vm124, %v685, 0.0
  %696 = vadd.xlane.f32.xlu0 %v695
  %v697 = vpop.xlane.xlu0 %696
  %v698 = vrcp.pop %v688
  %v699 = vrcp.pop %v691
  %v700 = vrcp.pop %v694
  %v701 = vrcp.pop %v697
  %v702 = vmul.f32 %v679, %v698
  %v703 = vmul.f32 %v681, %v699
  %v704 = vmul.f32 %v683, %v700
  %v705 = vmul.f32 %v685, %v701
  %v706 = vpack.c.bf16 %v703, %v702
  %v707 = vpack.c.bf16 %v705, %v704
  %710 = vrot.lane.b32.xlu0 %v424, 120
  %v711 = vpop.permute.xlu0 %710
  %712 = vrot.lane.b32.xlu0 %v425, 120
  %v713 = vpop.permute.xlu0 %712
  %v717 = vsel %vm124, %v706, 0
  %v720 = vsel %vm124, %v707, 0
  %722 = vmatprep.subr.bf16.mxu0 0
  %723 = vmatpush1.bf16.msra.mxu0 %v711
  %724 = vmatprep.subr.bf16.mxu0 0
  %725 = vmatpush1.bf16.msra.mxu0 %v713
  %726 = vmatprep.subr.bf16.mxu0 0
  %727 = vmatpush1.bf16.msra.mxu0 0
  %728 = vmatprep.subr.bf16.mxu0 0
  %729 = vmatpush1.bf16.msra.mxu0 0
  %730 = vmatprep.subr.bf16.mxu0 0
  %731 = vmatpush1.bf16.msra.mxu0 0
  %732 = vmatprep.subr.bf16.mxu0 0
  %733 = vmatpush1.bf16.msra.mxu0 0
  %734 = vmatprep.subr.bf16.mxu0 0
  %735 = vmatpush1.bf16.msra.mxu0 0
  %736 = vmatprep.subr.bf16.mxu0 0
  %737 = vmatpush1.bf16.msra.mxu0 0
  %738 = vmatprep.subr.bf16.mxu0 0
  %739 = vmatpush1.bf16.msra.mxu0 0
  %740 = vmatprep.subr.bf16.mxu0 0
  %741 = vmatpush1.bf16.msra.mxu0 0
  %742 = vmatprep.subr.bf16.mxu0 0
  %743 = vmatpush1.bf16.msra.mxu0 0
  %744 = vmatprep.subr.bf16.mxu0 0
  %745 = vmatpush1.bf16.msra.mxu0 0
  %746 = vmatprep.subr.bf16.mxu0 0
  %747 = vmatpush1.bf16.msra.mxu0 0
  %748 = vmatprep.subr.bf16.mxu0 0
  %749 = vmatpush1.bf16.msra.mxu0 0
  %750 = vmatprep.subr.bf16.mxu0 0
  %751 = vmatpush1.bf16.msra.mxu0 0
  %752 = vmatprep.subr.bf16.mxu0 0
  %753 = vmatpush1.bf16.msra.mxu0 0
  %754 = vmatprep.mubr.bf16.mxu0 0
  %755 = vmatmul.mubr.bf16.gmra.mrb[0].mxu0 %v717
  %v756 = vpop.f32.mrb[0].mxu0
  %v757 = vadd.f32 0.0, %v756
  %v758 = vpop.f32.mrb[0].mxu0
  %v759 = vpop.f32.mrb[0].mxu0
  %v760 = vadd.f32 0.0, %v759
  %v761 = vpop.f32.mrb[0].mxu0
  %762 = vmatprep.mubr.bf16.mxu0 0
  %763 = vmatmul.mubr.bf16.gmra.mrb[0].mxu0 %v720
  %v764 = vpop.f32.mrb[0].mxu0
  %v765 = vadd.f32 0.0, %v764
  %v766 = vpop.f32.mrb[0].mxu0
  %v767 = vpop.f32.mrb[0].mxu0
  %v768 = vadd.f32 0.0, %v767
  %v769 = vpop.f32.mrb[0].mxu0
  %770 = vdwg.mxu0
  %771 = vrot.lane.b32.xlu0 %v420, 112
  %v772 = vpop.permute.xlu0 %771
  %773 = vrot.lane.b32.xlu0 %v421, 112
  %v774 = vpop.permute.xlu0 %773
  %775 = vrot.lane.b32.xlu0 %v422, 112
  %v776 = vpop.permute.xlu0 %775
  %777 = vrot.lane.b32.xlu0 %v423, 112
  %v778 = vpop.permute.xlu0 %777
  %v780 = vsel %vm426, %v772, 0
  %v783 = vsel %vm426, %v774, 0
  %v786 = vsel %vm426, %v776, 0
  %v789 = vsel %vm426, %v778, 0
  %791 = vmatprep.subr.bf16.mxu0 0
  %792 = vmatpush1.bf16.xpose.msra.mxu0 %v786
  %793 = vmatprep.subr.bf16.mxu0 0
  %794 = vmatpush1.bf16.xpose.msra.mxu0 %v789
  %795 = vmatprep.subr.bf16.mxu0 0
  %796 = vmatpush1.bf16.xpose.msra.mxu0 0
  %797 = vmatprep.subr.bf16.mxu0 0
  %798 = vmatpush1.bf16.xpose.msra.mxu0 0
  %799 = vmatprep.subr.bf16.mxu0 0
  %800 = vmatpush1.bf16.xpose.msra.mxu0 0
  %801 = vmatprep.subr.bf16.mxu0 0
  %802 = vmatpush1.bf16.xpose.msra.mxu0 0
  %803 = vmatprep.subr.bf16.mxu0 0
  %804 = vmatpush1.bf16.xpose.msra.mxu0 0
  %805 = vmatprep.subr.bf16.mxu0 0
  %806 = vmatpush1.bf16.xpose.msra.mxu0 0
  %807 = vmatprep.subr.bf16.mxu0 0
  %808 = vmatpush1.bf16.xpose.msra.mxu0 0
  %809 = vmatprep.subr.bf16.mxu0 0
  %810 = vmatpush1.bf16.xpose.msra.mxu0 0
  %811 = vmatprep.subr.bf16.mxu0 0
  %812 = vmatpush1.bf16.xpose.msra.mxu0 0
  %813 = vmatprep.subr.bf16.mxu0 0
  %814 = vmatpush1.bf16.xpose.msra.mxu0 0
  %815 = vmatprep.subr.bf16.mxu0 0
  %816 = vmatpush1.bf16.xpose.msra.mxu0 0
  %817 = vmatprep.subr.bf16.mxu0 0
  %818 = vmatpush1.bf16.xpose.msra.mxu0 0
  %819 = vmatprep.subr.bf16.mxu0 0
  %820 = vmatpush1.bf16.xpose.msra.mxu0 0
  %821 = vmatprep.subr.bf16.mxu0 0
  %822 = vmatpush1.bf16.xpose.msra.mxu0 0
  %823 = vmatprep.mubr.bf16.mxu0 0
  %824 = vmatmul.mubr.bf16.gmra.mrb[0].mxu0 %v780
  %v825 = vpop.f32.mrb[0].mxu0
  %v826 = vadd.f32 %v412, %v825
  %v827 = vpop.f32.mrb[0].mxu0
  %v828 = vpop.f32.mrb[0].mxu0
  %v829 = vadd.f32 %v413, %v828
  %v830 = vpop.f32.mrb[0].mxu0
  %831 = vmatprep.mubr.bf16.mxu0 0
  %832 = vmatmul.mubr.bf16.gmra.mrb[0].mxu0 %v783
  %v833 = vpop.f32.mrb[0].mxu0
  %v834 = vadd.f32 %v414, %v833
  %v835 = vpop.f32.mrb[0].mxu0
  %v836 = vpop.f32.mrb[0].mxu0
  %v837 = vadd.f32 %v415, %v836
  %v838 = vpop.f32.mrb[0].mxu0
  %839 = vdwg.mxu0
  %v840 = vsel %vm124, %v826, -inf
  %841 = vmax.xlane.f32.xlu0 %v840
  %v842 = vpop.xlane.xlu0 %841
  %v843 = vsel %vm124, %v829, -inf
  %844 = vmax.xlane.f32.xlu0 %v843
  %v845 = vpop.xlane.xlu0 %844
  %v846 = vsel %vm124, %v834, -inf
  %847 = vmax.xlane.f32.xlu0 %v846
  %v848 = vpop.xlane.xlu0 %847
  %v849 = vsel %vm124, %v837, -inf
  %850 = vmax.xlane.f32.xlu0 %v849
  %v851 = vpop.xlane.xlu0 %850
  %v852 = vsub.f32 %v826, %v842
  %v853 = vsub.f32 %v829, %v845
  %v854 = vsub.f32 %v834, %v848
  %v855 = vsub.f32 %v837, %v851
  %v856 = vmul.f32 %v852, 1.442695
  %v857 = vpow.pop %v856
  %v858 = vmul.f32 %v853, 1.442695
  %v859 = vpow.pop %v858
  %v860 = vmul.f32 %v854, 1.442695
  %v861 = vpow.pop %v860
  %v862 = vmul.f32 %v855, 1.442695
  %v863 = vpow.pop %v862
  %v864 = vsel %vm124, %v857, 0.0
  %865 = vadd.xlane.f32.xlu0 %v864
  %v866 = vpop.xlane.xlu0 %865
  %v867 = vsel %vm124, %v859, 0.0
  %868 = vadd.xlane.f32.xlu0 %v867
  %v869 = vpop.xlane.xlu0 %868
  %v870 = vsel %vm124, %v861, 0.0
  %871 = vadd.xlane.f32.xlu0 %v870
  %v872 = vpop.xlane.xlu0 %871
  %v873 = vsel %vm124, %v863, 0.0
  %874 = vadd.xlane.f32.xlu0 %v873
  %v875 = vpop.xlane.xlu0 %874
  %v876 = vrcp.pop %v866
  %v877 = vrcp.pop %v869
  %v878 = vrcp.pop %v872
  %v879 = vrcp.pop %v875
  %v880 = vmul.f32 %v857, %v876
  %v881 = vmul.f32 %v859, %v877
  %v882 = vmul.f32 %v861, %v878
  %v883 = vmul.f32 %v863, %v879
  %v884 = vpack.c.bf16 %v881, %v880
  %v885 = vpack.c.bf16 %v883, %v882
  %886 = vrot.lane.b32.xlu0 %v424, 112
  %v887 = vpop.permute.xlu0 %886
  %888 = vrot.lane.b32.xlu0 %v425, 112
  %v889 = vpop.permute.xlu0 %888
  %v893 = vsel %vm124, %v884, 0
  %v896 = vsel %vm124, %v885, 0
  %898 = vmatprep.subr.bf16.mxu0 0
  %899 = vmatpush1.bf16.msra.mxu0 %v887
  %900 = vmatprep.subr.bf16.mxu0 0
  %901 = vmatpush1.bf16.msra.mxu0 %v889
  %902 = vmatprep.subr.bf16.mxu0 0
  %903 = vmatpush1.bf16.msra.mxu0 0
  %904 = vmatprep.subr.bf16.mxu0 0
  %905 = vmatpush1.bf16.msra.mxu0 0
  %906 = vmatprep.subr.bf16.mxu0 0
  %907 = vmatpush1.bf16.msra.mxu0 0
  %908 = vmatprep.subr.bf16.mxu0 0
  %909 = vmatpush1.bf16.msra.mxu0 0
  %910 = vmatprep.subr.bf16.mxu0 0
  %911 = vmatpush1.bf16.msra.mxu0 0
  %912 = vmatprep.subr.bf16.mxu0 0
  %913 = vmatpush1.bf16.msra.mxu0 0
  %914 = vmatprep.subr.bf16.mxu0 0
  %915 = vmatpush1.bf16.msra.mxu0 0
  %916 = vmatprep.subr.bf16.mxu0 0
  %917 = vmatpush1.bf16.msra.mxu0 0
  %918 = vmatprep.subr.bf16.mxu0 0
  %919 = vmatpush1.bf16.msra.mxu0 0
  %920 = vmatprep.subr.bf16.mxu0 0
  %921 = vmatpush1.bf16.msra.mxu0 0
  %922 = vmatprep.subr.bf16.mxu0 0
  %923 = vmatpush1.bf16.msra.mxu0 0
  %924 = vmatprep.subr.bf16.mxu0 0
  %925 = vmatpush1.bf16.msra.mxu0 0
  %926 = vmatprep.subr.bf16.mxu0 0
  %927 = vmatpush1.bf16.msra.mxu0 0
  %928 = vmatprep.subr.bf16.mxu0 0
  %929 = vmatpush1.bf16.msra.mxu0 0
  %930 = vmatprep.mubr.bf16.mxu0 0
  %931 = vmatmul.mubr.bf16.gmra.mrb[0].mxu0 %v893
  %v932 = vpop.f32.mrb[0].mxu0
  %v933 = vadd.f32 0.0, %v932
  %v934 = vpop.f32.mrb[0].mxu0
  %v935 = vpop.f32.mrb[0].mxu0
  %v936 = vadd.f32 0.0, %v935
  %v937 = vpop.f32.mrb[0].mxu0
  %938 = vmatprep.mubr.bf16.mxu0 0
  %939 = vmatmul.mubr.bf16.gmra.mrb[0].mxu0 %v896
  %v940 = vpop.f32.mrb[0].mxu0
  %v941 = vadd.f32 0.0, %v940
  %v942 = vpop.f32.mrb[0].mxu0
  %v943 = vpop.f32.mrb[0].mxu0
  %v944 = vadd.f32 0.0, %v943
  %v945 = vpop.f32.mrb[0].mxu0
  %946 = vdwg.mxu0
  %947 = vrot.lane.b32.xlu0 %v420, 104
  %v948 = vpop.permute.xlu0 %947
  %949 = vrot.lane.b32.xlu0 %v421, 104
  %v950 = vpop.permute.xlu0 %949
  %951 = vrot.lane.b32.xlu0 %v422, 104
  %v952 = vpop.permute.xlu0 %951
  %953 = vrot.lane.b32.xlu0 %v423, 104
  %v954 = vpop.permute.xlu0 %953
  %v956 = vsel %vm426, %v948, 0
  %v959 = vsel %vm426, %v950, 0
  %v962 = vsel %vm426, %v952, 0
  %v965 = vsel %vm426, %v954, 0
  %967 = vmatprep.subr.bf16.mxu0 0
  %968 = vmatpush1.bf16.xpose.msra.mxu0 %v962
  %969 = vmatprep.subr.bf16.mxu0 0
  %970 = vmatpush1.bf16.xpose.msra.mxu0 %v965
  %971 = vmatprep.subr.bf16.mxu0 0
  %972 = vmatpush1.bf16.xpose.msra.mxu0 0
  %973 = vmatprep.subr.bf16.mxu0 0
  %974 = vmatpush1.bf16.xpose.msra.mxu0 0
  %975 = vmatprep.subr.bf16.mxu0 0
  %976 = vmatpush1.bf16.xpose.msra.mxu0 0
  %977 = vmatprep.subr.bf16.mxu0 0
  %978 = vmatpush1.bf16.xpose.msra.mxu0 0
  %979 = vmatprep.subr.bf16.mxu0 0
  %980 = vmatpush1.bf16.xpose.msra.mxu0 0
  %981 = vmatprep.subr.bf16.mxu0 0
  %982 = vmatpush1.bf16.xpose.msra.mxu0 0
  %983 = vmatprep.subr.bf16.mxu0 0
  %984 = vmatpush1.bf16.xpose.msra.mxu0 0
  %985 = vmatprep.subr.bf16.mxu0 0
  %986 = vmatpush1.bf16.xpose.msra.mxu0 0
  %987 = vmatprep.subr.bf16.mxu0 0
  %988 = vmatpush1.bf16.xpose.msra.mxu0 0
  %989 = vmatprep.subr.bf16.mxu0 0
  %990 = vmatpush1.bf16.xpose.msra.mxu0 0
  %991 = vmatprep.subr.bf16.mxu0 0
  %992 = vmatpush1.bf16.xpose.msra.mxu0 0
  %993 = vmatprep.subr.bf16.mxu0 0
  %994 = vmatpush1.bf16.xpose.msra.mxu0 0
  %995 = vmatprep.subr.bf16.mxu0 0
  %996 = vmatpush1.bf16.xpose.msra.mxu0 0
  %997 = vmatprep.subr.bf16.mxu0 0
  %998 = vmatpush1.bf16.xpose.msra.mxu0 0
  %999 = vmatprep.mubr.bf16.mxu0 0
  %1000 = vmatmul.mubr.bf16.gmra.mrb[0].mxu0 %v956
  %v1001 = vpop.f32.mrb[0].mxu0
  %v1002 = vadd.f32 %v412, %v1001
  %v1003 = vpop.f32.mrb[0].mxu0
  %v1004 = vpop.f32.mrb[0].mxu0
  %v1005 = vadd.f32 %v413, %v1004
  %v1006 = vpop.f32.mrb[0].mxu0
  %1007 = vmatprep.mubr.bf16.mxu0 0
  %1008 = vmatmul.mubr.bf16.gmra.mrb[0].mxu0 %v959
  %v1009 = vpop.f32.mrb[0].mxu0
  %v1010 = vadd.f32 %v414, %v1009
  %v1011 = vpop.f32.mrb[0].mxu0
  %v1012 = vpop.f32.mrb[0].mxu0
  %v1013 = vadd.f32 %v415, %v1012
  %v1014 = vpop.f32.mrb[0].mxu0
  %1015 = vdwg.mxu0
  %v1016 = vsel %vm124, %v1002, -inf
  %1017 = vmax.xlane.f32.xlu0 %v1016
  %v1018 = vpop.xlane.xlu0 %1017
  %v1019 = vsel %vm124, %v1005, -inf
  %1020 = vmax.xlane.f32.xlu0 %v1019
  %v1021 = vpop.xlane.xlu0 %1020
  %v1022 = vsel %vm124, %v1010, -inf
  %1023 = vmax.xlane.f32.xlu0 %v1022
  %v1024 = vpop.xlane.xlu0 %1023
  %v1025 = vsel %vm124, %v1013, -inf
  %1026 = vmax.xlane.f32.xlu0 %v1025
  %v1027 = vpop.xlane.xlu0 %1026
  %v1028 = vsub.f32 %v1002, %v1018
  %v1029 = vsub.f32 %v1005, %v1021
  %v1030 = vsub.f32 %v1010, %v1024
  %v1031 = vsub.f32 %v1013, %v1027
  %v1032 = vmul.f32 %v1028, 1.442695
  %v1033 = vpow.pop %v1032
  %v1034 = vmul.f32 %v1029, 1.442695
  %v1035 = vpow.pop %v1034
  %v1036 = vmul.f32 %v1030, 1.442695
  %v1037 = vpow.pop %v1036
  %v1038 = vmul.f32 %v1031, 1.442695
  %v1039 = vpow.pop %v1038
  %v1040 = vsel %vm124, %v1033, 0.0
  %1041 = vadd.xlane.f32.xlu0 %v1040
  %v1042 = vpop.xlane.xlu0 %1041
  %v1043 = vsel %vm124, %v1035, 0.0
  %1044 = vadd.xlane.f32.xlu0 %v1043
  %v1045 = vpop.xlane.xlu0 %1044
  %v1046 = vsel %vm124, %v1037, 0.0
  %1047 = vadd.xlane.f32.xlu0 %v1046
  %v1048 = vpop.xlane.xlu0 %1047
  %v1049 = vsel %vm124, %v1039, 0.0
  %1050 = vadd.xlane.f32.xlu0 %v1049
  %v1051 = vpop.xlane.xlu0 %1050
  %v1052 = vrcp.pop %v1042
  %v1053 = vrcp.pop %v1045
  %v1054 = vrcp.pop %v1048
  %v1055 = vrcp.pop %v1051
  %v1056 = vmul.f32 %v1033, %v1052
  %v1057 = vmul.f32 %v1035, %v1053
  %v1058 = vmul.f32 %v1037, %v1054
  %v1059 = vmul.f32 %v1039, %v1055
  %v1060 = vpack.c.bf16 %v1057, %v1056
  %v1061 = vpack.c.bf16 %v1059, %v1058
  %1062 = vrot.lane.b32.xlu0 %v424, 104
  %v1063 = vpop.permute.xlu0 %1062
  %1064 = vrot.lane.b32.xlu0 %v425, 104
  %v1065 = vpop.permute.xlu0 %1064
  %v1069 = vsel %vm124, %v1060, 0
  %v1072 = vsel %vm124, %v1061, 0
  %1074 = vmatprep.subr.bf16.mxu0 0
  %1075 = vmatpush1.bf16.msra.mxu0 %v1063
  %1076 = vmatprep.subr.bf16.mxu0 0
  %1077 = vmatpush1.bf16.msra.mxu0 %v1065
  %1078 = vmatprep.subr.bf16.mxu0 0
  %1079 = vmatpush1.bf16.msra.mxu0 0
  %1080 = vmatprep.subr.bf16.mxu0 0
  %1081 = vmatpush1.bf16.msra.mxu0 0
  %1082 = vmatprep.subr.bf16.mxu0 0
  %1083 = vmatpush1.bf16.msra.mxu0 0
  %1084 = vmatprep.subr.bf16.mxu0 0
  %1085 = vmatpush1.bf16.msra.mxu0 0
  %1086 = vmatprep.subr.bf16.mxu0 0
  %1087 = vmatpush1.bf16.msra.mxu0 0
  %1088 = vmatprep.subr.bf16.mxu0 0
  %1089 = vmatpush1.bf16.msra.mxu0 0
  %1090 = vmatprep.subr.bf16.mxu0 0
  %1091 = vmatpush1.bf16.msra.mxu0 0
  %1092 = vmatprep.subr.bf16.mxu0 0
  %1093 = vmatpush1.bf16.msra.mxu0 0
  %1094 = vmatprep.subr.bf16.mxu0 0
  %1095 = vmatpush1.bf16.msra.mxu0 0
  %1096 = vmatprep.subr.bf16.mxu0 0
  %1097 = vmatpush1.bf16.msra.mxu0 0
  %1098 = vmatprep.subr.bf16.mxu0 0
  %1099 = vmatpush1.bf16.msra.mxu0 0
  %1100 = vmatprep.subr.bf16.mxu0 0
  %1101 = vmatpush1.bf16.msra.mxu0 0
  %1102 = vmatprep.subr.bf16.mxu0 0
  %1103 = vmatpush1.bf16.msra.mxu0 0
  %1104 = vmatprep.subr.bf16.mxu0 0
  %1105 = vmatpush1.bf16.msra.mxu0 0
  %1106 = vmatprep.mubr.bf16.mxu0 0
  %1107 = vmatmul.mubr.bf16.gmra.mrb[0].mxu0 %v1069
  %v1108 = vpop.f32.mrb[0].mxu0
  %v1109 = vadd.f32 0.0, %v1108
  %v1110 = vpop.f32.mrb[0].mxu0
  %v1111 = vpop.f32.mrb[0].mxu0
  %v1112 = vadd.f32 0.0, %v1111
  %v1113 = vpop.f32.mrb[0].mxu0
  %1114 = vmatprep.mubr.bf16.mxu0 0
  %1115 = vmatmul.mubr.bf16.gmra.mrb[0].mxu0 %v1072
  %v1116 = vpop.f32.mrb[0].mxu0
  %v1117 = vadd.f32 0.0, %v1116
  %v1118 = vpop.f32.mrb[0].mxu0
  %v1119 = vpop.f32.mrb[0].mxu0
  %v1120 = vadd.f32 0.0, %v1119
  %v1121 = vpop.f32.mrb[0].mxu0
  %1122 = vdwg.mxu0
  %1127 = vrot.lane.b32.xlu0 %v757, 8
  %v1128 = vpop.permute.xlu0 %1127
  %1129 = vrot.lane.b32.xlu0 %v760, 8
  %v1130 = vpop.permute.xlu0 %1129
  %1131 = vrot.lane.b32.xlu0 %v765, 8
  %v1132 = vpop.permute.xlu0 %1131
  %1133 = vrot.lane.b32.xlu0 %v768, 8
  %v1134 = vpop.permute.xlu0 %1133
  %1143 = vrot.lane.b32.xlu0 %v933, 16
  %v1144 = vpop.permute.xlu0 %1143
  %1145 = vrot.lane.b32.xlu0 %v936, 16
  %v1146 = vpop.permute.xlu0 %1145
  %1147 = vrot.lane.b32.xlu0 %v941, 16
  %v1148 = vpop.permute.xlu0 %1147
  %1149 = vrot.lane.b32.xlu0 %v944, 16
  %v1150 = vpop.permute.xlu0 %1149
  %1159 = vrot.lane.b32.xlu0 %v1109, 24
  %v1160 = vpop.permute.xlu0 %1159
  %1161 = vrot.lane.b32.xlu0 %v1112, 24
  %v1162 = vpop.permute.xlu0 %1161
  %1163 = vrot.lane.b32.xlu0 %v1117, 24
  %v1164 = vpop.permute.xlu0 %1163
  %1165 = vrot.lane.b32.xlu0 %v1120, 24
  %v1166 = vpop.permute.xlu0 %1165
  %v1171 = vsel %vm426, %v575, %v1128
  %v1172 = vsel %vm426, %v578, %v1130
  %v1173 = vsel %vm426, %v583, %v1132
  %v1174 = vsel %vm426, %v586, %v1134
  %vm1175 = vcmask 130048
  %v1176 = vsel %vm1175, %v1171, %v1144
  %v1177 = vsel %vm1175, %v1172, %v1146
  %v1178 = vsel %vm1175, %v1173, %v1148
  %v1179 = vsel %vm1175, %v1174, %v1150
  %vm1180 = vcmask 195584
  %v1181 = vsel %vm1180, %v1176, %v1160
  %v1182 = vsel %vm1180, %v1177, %v1162
  %v1183 = vsel %vm1180, %v1178, %v1164
  %v1184 = vsel %vm1180, %v1179, %v1166
  %v1185 = vld [vmem:[%s1 + $0x50] sm:$0xf]
  %v1186 = vld [vmem:[%s1 + $0x54] sm:$0xf]
  %v1187 = vld [vmem:[%s1 + $0x58] sm:$0xf]
  %v1188 = vld [vmem:[%s1 + $0x5c] sm:$0xf]
  %v1189 = vpack.c.bf16 %v1182, %v1181
  %v1190 = vpack.c.bf16 %v1184, %v1183
  %v1195 = vunpack.c.l.b16 %v1185
  %v1196 = vunpack.c.l.b16 %v1186
  %v1197 = vunpack.c.l.b16 %v1187
  %v1198 = vunpack.c.l.b16 %v1188
  %v1199 = vpack.c.b16 %v1196, %v1195
  %v1200 = vpack.c.b16 %v1198, %v1197
  %v1204 = vsel %vm124, %v1189, 0
  %v1207 = vsel %vm124, %v1190, 0
  %1209 = vmatprep.subr.bf16.mxu0 0
  %1210 = vmatpush1.bf16.msra.mxu0 %v1199
  %1211 = vmatprep.subr.bf16.mxu0 0
  %1212 = vmatpush1.bf16.msra.mxu0 %v1200
  %1213 = vmatprep.subr.bf16.mxu0 0
  %1214 = vmatpush1.bf16.msra.mxu0 0
  %1215 = vmatprep.subr.bf16.mxu0 0
  %1216 = vmatpush1.bf16.msra.mxu0 0
  %1217 = vmatprep.subr.bf16.mxu0 0
  %1218 = vmatpush1.bf16.msra.mxu0 0
  %1219 = vmatprep.subr.bf16.mxu0 0
  %1220 = vmatpush1.bf16.msra.mxu0 0
  %1221 = vmatprep.subr.bf16.mxu0 0
  %1222 = vmatpush1.bf16.msra.mxu0 0
  %1223 = vmatprep.subr.bf16.mxu0 0
  %1224 = vmatpush1.bf16.msra.mxu0 0
  %1225 = vmatprep.subr.bf16.mxu0 0
  %1226 = vmatpush1.bf16.msra.mxu0 0
  %1227 = vmatprep.subr.bf16.mxu0 0
  %1228 = vmatpush1.bf16.msra.mxu0 0
  %1229 = vmatprep.subr.bf16.mxu0 0
  %1230 = vmatpush1.bf16.msra.mxu0 0
  %1231 = vmatprep.subr.bf16.mxu0 0
  %1232 = vmatpush1.bf16.msra.mxu0 0
  %1233 = vmatprep.subr.bf16.mxu0 0
  %1234 = vmatpush1.bf16.msra.mxu0 0
  %1235 = vmatprep.subr.bf16.mxu0 0
  %1236 = vmatpush1.bf16.msra.mxu0 0
  %1237 = vmatprep.subr.bf16.mxu0 0
  %1238 = vmatpush1.bf16.msra.mxu0 0
  %1239 = vmatprep.subr.bf16.mxu0 0
  %1240 = vmatpush1.bf16.msra.mxu0 0
  %1241 = vmatprep.mubr.bf16.mxu0 0
  %1242 = vmatmul.mubr.bf16.gmra.mrb[0].mxu0 %v1204
  %v1243 = vpop.f32.mrb[0].mxu0
  %v1244 = vadd.f32 0.0, %v1243
  %v1245 = vpop.f32.mrb[0].mxu0
  %v1246 = vpop.f32.mrb[0].mxu0
  %v1247 = vadd.f32 0.0, %v1246
  %v1248 = vpop.f32.mrb[0].mxu0
  %1249 = vmatprep.mubr.bf16.mxu0 0
  %1250 = vmatmul.mubr.bf16.gmra.mrb[0].mxu0 %v1207
  %v1251 = vpop.f32.mrb[0].mxu0
  %v1252 = vadd.f32 0.0, %v1251
  %v1253 = vpop.f32.mrb[0].mxu0
  %v1254 = vpop.f32.mrb[0].mxu0
  %v1255 = vadd.f32 0.0, %v1254
  %v1256 = vpop.f32.mrb[0].mxu0
  %1257 = vdwg.mxu0
  %v1258 = vadd.f32 %v108, %v1244
  %v1259 = vadd.f32 %v111, %v1247
  %v1260 = vadd.f32 %v116, %v1252
  %v1261 = vadd.f32 %v119, %v1255
  %v1262 = vld [vmem:[%s2 + $0x90] sm:$0x1]
  %v1263 = vlaneseq
  %v1264 = vshrl.u32 %v1263, 7
  %v1265 = vsub.s32 0, %v1264
  %v1266 = vrot.slane %v1262, %v1265
  %v1267 = vadd.f32 %v1258, %v1266
  %v1268 = vadd.f32 %v1259, %v1266
  %v1269 = vadd.f32 %v1260, %v1266
  %v1270 = vadd.f32 %v1261, %v1266
  %v1271 = vld [vmem:[%s2 + $0x98] sm:$0x1]
  %v1272 = vld [vmem:[%s2 + $0xa0] sm:$0x1]
  %v1273 = vsel %vm124, %v1267, 0.0
  %1274 = vadd.xlane.f32.xlu0 %v1273
  %v1275 = vpop.xlane.xlu0 %1274
  %v1276 = vsel %vm124, %v1268, 0.0
  %1277 = vadd.xlane.f32.xlu0 %v1276
  %v1278 = vpop.xlane.xlu0 %1277
  %v1279 = vsel %vm124, %v1269, 0.0
  %1280 = vadd.xlane.f32.xlu0 %v1279
  %v1281 = vpop.xlane.xlu0 %1280
  %v1282 = vsel %vm124, %v1270, 0.0
  %1283 = vadd.xlane.f32.xlu0 %v1282
  %v1284 = vpop.xlane.xlu0 %1283
  %v1285 = vmul.f32 %v1275, %v137
  %v1286 = vmul.f32 %v1278, %v137
  %v1287 = vmul.f32 %v1281, %v137
  %v1288 = vmul.f32 %v1284, %v137
  %v1289 = vsub.f32 %v1267, %v1285
  %v1290 = vsub.f32 %v1268, %v1286
  %v1291 = vsub.f32 %v1269, %v1287
  %v1292 = vsub.f32 %v1270, %v1288
  %v1293 = vmul.f32 %v1289, %v1289
  %v1294 = vmul.f32 %v1290, %v1290
  %v1295 = vmul.f32 %v1291, %v1291
  %v1296 = vmul.f32 %v1292, %v1292
  %v1297 = vsel %vm124, %v1293, 0.0
  %1298 = vadd.xlane.f32.xlu0 %v1297
  %v1299 = vpop.xlane.xlu0 %1298
  %v1300 = vsel %vm124, %v1294, 0.0
  %1301 = vadd.xlane.f32.xlu0 %v1300
  %v1302 = vpop.xlane.xlu0 %1301
  %v1303 = vsel %vm124, %v1295, 0.0
  %1304 = vadd.xlane.f32.xlu0 %v1303
  %v1305 = vpop.xlane.xlu0 %1304
  %v1306 = vsel %vm124, %v1296, 0.0
  %1307 = vadd.xlane.f32.xlu0 %v1306
  %v1308 = vpop.xlane.xlu0 %1307
  %v1309 = vmul.f32 %v1299, %v137
  %v1310 = vmul.f32 %v1302, %v137
  %v1311 = vmul.f32 %v1305, %v137
  %v1312 = vmul.f32 %v1308, %v137
  %v1313 = vadd.f32 %v1309, 1e-06
  %v1314 = vadd.f32 %v1310, 1e-06
  %v1315 = vadd.f32 %v1311, 1e-06
  %v1316 = vadd.f32 %v1312, 1e-06
  %v1317 = vrsqrt.pop %v1313
  %v1318 = vrsqrt.pop %v1314
  %v1319 = vrsqrt.pop %v1315
  %v1320 = vrsqrt.pop %v1316
  %v1321 = vmul.f32 %v1289, %v1317
  %v1322 = vmul.f32 %v1290, %v1318
  %v1323 = vmul.f32 %v1291, %v1319
  %v1324 = vmul.f32 %v1292, %v1320
  %v1325 = vlaneseq
  %v1326 = vshrl.u32 %v1325, 7
  %v1327 = vsub.s32 0, %v1326
  %v1328 = vrot.slane %v1271, %v1327
  %v1329 = vmul.f32 %v1321, %v1328
  %v1330 = vmul.f32 %v1322, %v1328
  %v1331 = vmul.f32 %v1323, %v1328
  %v1332 = vmul.f32 %v1324, %v1328
  %v1333 = vlaneseq
  %v1334 = vshrl.u32 %v1333, 7
  %v1335 = vsub.s32 0, %v1334
  %v1336 = vrot.slane %v1272, %v1335
  %v1337 = vadd.f32 %v1329, %v1336
  %v1338 = vadd.f32 %v1330, %v1336
  %v1339 = vadd.f32 %v1331, %v1336
  %v1340 = vadd.f32 %v1332, %v1336
  %v1341 = vld [vmem:[%s1 + $0x60] sm:$0xf]
  %v1342 = vld [vmem:[%s1 + $0x64] sm:$0xf]
  %v1343 = vld [vmem:[%s1 + $0x68] sm:$0xf]
  %v1344 = vld [vmem:[%s1 + $0x6c] sm:$0xf]
  %v1345 = vpack.c.bf16 %v1338, %v1337
  %v1346 = vpack.c.bf16 %v1340, %v1339
  %v1347 = vld [vmem:[%s2 + $0xa8] sm:$0x1]
  %v1348 = vlaneseq
  %v1349 = vshrl.u32 %v1348, 7
  %v1350 = vsub.s32 0, %v1349
  %v1351 = vrot.slane %v1347, %v1350
  %v1356 = vunpack.c.l.b16 %v1341
  %v1357 = vunpack.c.l.b16 %v1342
  %v1358 = vunpack.c.l.b16 %v1343
  %v1359 = vunpack.c.l.b16 %v1344
  %v1360 = vpack.c.b16 %v1357, %v1356
  %v1361 = vpack.c.b16 %v1359, %v1358
  %v1365 = vsel %vm124, %v1345, 0
  %v1368 = vsel %vm124, %v1346, 0
  %1370 = vmatprep.subr.bf16.mxu0 0
  %1371 = vmatpush1.bf16.msra.mxu0 %v1360
  %1372 = vmatprep.subr.bf16.mxu0 0
  %1373 = vmatpush1.bf16.msra.mxu0 %v1361
  %1374 = vmatprep.subr.bf16.mxu0 0
  %1375 = vmatpush1.bf16.msra.mxu0 0
  %1376 = vmatprep.subr.bf16.mxu0 0
  %1377 = vmatpush1.bf16.msra.mxu0 0
  %1378 = vmatprep.subr.bf16.mxu0 0
  %1379 = vmatpush1.bf16.msra.mxu0 0
  %1380 = vmatprep.subr.bf16.mxu0 0
  %1381 = vmatpush1.bf16.msra.mxu0 0
  %1382 = vmatprep.subr.bf16.mxu0 0
  %1383 = vmatpush1.bf16.msra.mxu0 0
  %1384 = vmatprep.subr.bf16.mxu0 0
  %1385 = vmatpush1.bf16.msra.mxu0 0
  %1386 = vmatprep.subr.bf16.mxu0 0
  %1387 = vmatpush1.bf16.msra.mxu0 0
  %1388 = vmatprep.subr.bf16.mxu0 0
  %1389 = vmatpush1.bf16.msra.mxu0 0
  %1390 = vmatprep.subr.bf16.mxu0 0
  %1391 = vmatpush1.bf16.msra.mxu0 0
  %1392 = vmatprep.subr.bf16.mxu0 0
  %1393 = vmatpush1.bf16.msra.mxu0 0
  %1394 = vmatprep.subr.bf16.mxu0 0
  %1395 = vmatpush1.bf16.msra.mxu0 0
  %1396 = vmatprep.subr.bf16.mxu0 0
  %1397 = vmatpush1.bf16.msra.mxu0 0
  %1398 = vmatprep.subr.bf16.mxu0 0
  %1399 = vmatpush1.bf16.msra.mxu0 0
  %1400 = vmatprep.subr.bf16.mxu0 0
  %1401 = vmatpush1.bf16.msra.mxu0 0
  %1402 = vmatprep.mubr.bf16.mxu0 0
  %1403 = vmatmul.mubr.bf16.gmra.mrb[0].mxu0 %v1365
  %v1404 = vpop.f32.mrb[0].mxu0
  %v1405 = vadd.f32 %v1351, %v1404
  %v1406 = vpop.f32.mrb[0].mxu0
  %v1407 = vpop.f32.mrb[0].mxu0
  %v1408 = vadd.f32 %v1351, %v1407
  %v1409 = vpop.f32.mrb[0].mxu0
  %1410 = vmatprep.mubr.bf16.mxu0 0
  %1411 = vmatmul.mubr.bf16.gmra.mrb[0].mxu0 %v1368
  %v1412 = vpop.f32.mrb[0].mxu0
  %v1413 = vadd.f32 %v1351, %v1412
  %v1414 = vpop.f32.mrb[0].mxu0
  %v1415 = vpop.f32.mrb[0].mxu0
  %v1416 = vadd.f32 %v1351, %v1415
  %v1417 = vpop.f32.mrb[0].mxu0
  %1418 = vdwg.mxu0
  %v1419 = vmul.f32 %v1405, %v1405
  %v1420 = vmul.f32 %v1408, %v1408
  %v1421 = vmul.f32 %v1413, %v1413
  %v1422 = vmul.f32 %v1416, %v1416
  %v1423 = vmul.f32 %v1405, %v1419
  %v1424 = vmul.f32 %v1408, %v1420
  %v1425 = vmul.f32 %v1413, %v1421
  %v1426 = vmul.f32 %v1416, %v1422
  %v1427 = vmul.f32 %v1423, 0.044715
  %v1428 = vmul.f32 %v1424, 0.044715
  %v1429 = vmul.f32 %v1425, 0.044715
  %v1430 = vmul.f32 %v1426, 0.044715
  %v1431 = vadd.f32 %v1405, %v1427
  %v1432 = vadd.f32 %v1408, %v1428
  %v1433 = vadd.f32 %v1413, %v1429
  %v1434 = vadd.f32 %v1416, %v1430
  %v1435 = vmul.f32 %v1431, 0.7978846
  %v1436 = vmul.f32 %v1432, 0.7978846
  %v1437 = vmul.f32 %v1433, 0.7978846
  %v1438 = vmul.f32 %v1434, 0.7978846
  %v1439 = vtanh.pop %v1435
  %v1440 = vtanh.pop %v1436
  %v1441 = vtanh.pop %v1437
  %v1442 = vtanh.pop %v1438
  %v1443 = vadd.f32 %v1439, 1.0
  %v1444 = vadd.f32 %v1440, 1.0
  %v1445 = vadd.f32 %v1441, 1.0
  %v1446 = vadd.f32 %v1442, 1.0
  %v1447 = vmul.f32 %v1443, 0.5
  %v1448 = vmul.f32 %v1444, 0.5
  %v1449 = vmul.f32 %v1445, 0.5
  %v1450 = vmul.f32 %v1446, 0.5
  %v1451 = vmul.f32 %v1405, %v1447
  %v1452 = vmul.f32 %v1408, %v1448
  %v1453 = vmul.f32 %v1413, %v1449
  %v1454 = vmul.f32 %v1416, %v1450
  %v1455 = vld [vmem:[%s1 + $0x70] sm:$0xf]
  %v1456 = vld [vmem:[%s1 + $0x74] sm:$0xf]
  %v1457 = vld [vmem:[%s1 + $0x78] sm:$0xf]
  %v1458 = vld [vmem:[%s1 + $0x7c] sm:$0xf]
  %v1459 = vld [vmem:[%s1 + $0x80] sm:$0xf]
  %v1460 = vld [vmem:[%s1 + $0x84] sm:$0xf]
  %v1461 = vld [vmem:[%s1 + $0x88] sm:$0xf]
  %v1462 = vld [vmem:[%s1 + $0x8c] sm:$0xf]
  %v1463 = vpack.c.bf16 %v1452, %v1451
  %v1464 = vpack.c.bf16 %v1454, %v1453
  %v1465 = vld [vmem:[%s2 + $0xb0] sm:$0x1]
  %v1466 = vlaneseq
  %v1467 = vshrl.u32 %v1466, 7
  %v1468 = vsub.s32 0, %v1467
  %v1469 = vrot.slane %v1465, %v1468
  %v1478 = vunpack.c.l.b16 %v1455
  %v1479 = vunpack.c.l.b16 %v1456
  %v1480 = vunpack.c.l.b16 %v1457
  %v1481 = vunpack.c.l.b16 %v1458
  %v1482 = vunpack.c.l.b16 %v1459
  %v1483 = vunpack.c.l.b16 %v1460
  %v1484 = vunpack.c.l.b16 %v1461
  %v1485 = vunpack.c.l.b16 %v1462
  %v1486 = vpack.c.b16 %v1479, %v1478
  %v1487 = vpack.c.b16 %v1481, %v1480
  %v1488 = vpack.c.b16 %v1483, %v1482
  %v1489 = vpack.c.b16 %v1485, %v1484
  %v1495 = vsel %vm66, %v1463, 0
  %v1498 = vsel %vm66, %v1464, 0
  %1500 = vmatprep.subr.bf16.mxu0 0
  %1501 = vmatpush1.bf16.msra.mxu0 %v1486
  %1502 = vmatprep.subr.bf16.mxu0 0
  %1503 = vmatpush1.bf16.msra.mxu0 %v1487
  %1504 = vmatprep.subr.bf16.mxu0 0
  %1505 = vmatpush1.bf16.msra.mxu0 %v1488
  %1506 = vmatprep.subr.bf16.mxu0 0
  %1507 = vmatpush1.bf16.msra.mxu0 %v1489
  %1508 = vmatprep.subr.bf16.mxu0 0
  %1509 = vmatpush1.bf16.msra.mxu0 0
  %1510 = vmatprep.subr.bf16.mxu0 0
  %1511 = vmatpush1.bf16.msra.mxu0 0
  %1512 = vmatprep.subr.bf16.mxu0 0
  %1513 = vmatpush1.bf16.msra.mxu0 0
  %1514 = vmatprep.subr.bf16.mxu0 0
  %1515 = vmatpush1.bf16.msra.mxu0 0
  %1516 = vmatprep.subr.bf16.mxu0 0
  %1517 = vmatpush1.bf16.msra.mxu0 0
  %1518 = vmatprep.subr.bf16.mxu0 0
  %1519 = vmatpush1.bf16.msra.mxu0 0
  %1520 = vmatprep.subr.bf16.mxu0 0
  %1521 = vmatpush1.bf16.msra.mxu0 0
  %1522 = vmatprep.subr.bf16.mxu0 0
  %1523 = vmatpush1.bf16.msra.mxu0 0
  %1524 = vmatprep.subr.bf16.mxu0 0
  %1525 = vmatpush1.bf16.msra.mxu0 0
  %1526 = vmatprep.subr.bf16.mxu0 0
  %1527 = vmatpush1.bf16.msra.mxu0 0
  %1528 = vmatprep.subr.bf16.mxu0 0
  %1529 = vmatpush1.bf16.msra.mxu0 0
  %1530 = vmatprep.subr.bf16.mxu0 0
  %1531 = vmatpush1.bf16.msra.mxu0 0
  %1532 = vmatprep.mubr.bf16.mxu0 0
  %1533 = vmatmul.mubr.bf16.gmra.mrb[0].mxu0 %v1495
  %v1534 = vpop.f32.mrb[0].mxu0
  %v1535 = vadd.f32 %v1469, %v1534
  %v1536 = vpop.f32.mrb[0].mxu0
  %v1537 = vpop.f32.mrb[0].mxu0
  %v1538 = vadd.f32 %v1469, %v1537
  %v1539 = vpop.f32.mrb[0].mxu0
  %1540 = vmatprep.mubr.bf16.mxu0 0
  %1541 = vmatmul.mubr.bf16.gmra.mrb[0].mxu0 %v1498
  %v1542 = vpop.f32.mrb[0].mxu0
  %v1543 = vadd.f32 %v1469, %v1542
  %v1544 = vpop.f32.mrb[0].mxu0
  %v1545 = vpop.f32.mrb[0].mxu0
  %v1546 = vadd.f32 %v1469, %v1545
  %v1547 = vpop.f32.mrb[0].mxu0
  %1548 = vdwg.mxu0
  %v1549 = vadd.f32 %v1267, %v1535
  %v1550 = vadd.f32 %v1268, %v1538
  %v1551 = vadd.f32 %v1269, %v1543
  %v1552 = vadd.f32 %v1270, %v1546
  %v1553 = vld [vmem:[%s2 + $0x10] sm:$0xff]
  %v1554 = vld [vmem:[%s2 + $0x18] sm:$0xff]
  %v1555 = vld [vmem:[%s2 + $0x20] sm:$0xff]
  %v1556 = vld [vmem:[%s2 + $0x28] sm:$0xff]
  %v1557 = vadd.f32 %v1549, %v1553
  %v1558 = vadd.f32 %v1550, %v1554
  %v1559 = vadd.f32 %v1551, %v1555
  %v1560 = vadd.f32 %v1552, %v1556
  %v1561 = vld [vmem:[%s2] sm:$0xff]
  %v1562 = vld [vmem:[%s2 + $0x8] sm:$0xff]
  %v1563 = vld [vmem:[%s1 + $0x90] sm:$0xf]
  %v1564 = vld [vmem:[%s1 + $0x94] sm:$0xf]
  %v1565 = vld [vmem:[%s1 + $0x98] sm:$0xf]
  %v1566 = vld [vmem:[%s1 + $0x9c] sm:$0xf]
  %v1567 = vpack.c.bf16 %v1562, %v1561
  %v1568 = vld [vmem:[%s2 + $0xb8] sm:$0x1]
  %v1569 = vlaneseq
  %v1570 = vshrl.u32 %v1569, 7
  %v1571 = vsub.s32 0, %v1570
  %v1572 = vrot.slane %v1568, %v1571
  %v1577 = vunpack.c.l.b16 %v1563
  %v1578 = vunpack.c.l.b16 %v1564
  %v1579 = vunpack.c.l.b16 %v1565
  %v1580 = vunpack.c.l.b16 %v1566
  %v1581 = vpack.c.b16 %v1578, %v1577
  %v1582 = vpack.c.b16 %v1580, %v1579
  %v1586 = vsel %vm124, %v1567, 0
  %1588 = vmatprep.subr.bf16.mxu0 0
  %1589 = vmatpush1.bf16.msra.mxu0 %v1581
  %1590 = vmatprep.subr.bf16.mxu0 0
  %1591 = vmatpush1.bf16.msra.mxu0 %v1582
  %1592 = vmatprep.subr.bf16.mxu0 0
  %1593 = vmatpush1.bf16.msra.mxu0 0
  %1594 = vmatprep.subr.bf16.mxu0 0
  %1595 = vmatpush1.bf16.msra.mxu0 0
  %1596 = vmatprep.subr.bf16.mxu0 0
  %1597 = vmatpush1.bf16.msra.mxu0 0
  %1598 = vmatprep.subr.bf16.mxu0 0
  %1599 = vmatpush1.bf16.msra.mxu0 0
  %1600 = vmatprep.subr.bf16.mxu0 0
  %1601 = vmatpush1.bf16.msra.mxu0 0
  %1602 = vmatprep.subr.bf16.mxu0 0
  %1603 = vmatpush1.bf16.msra.mxu0 0
  %1604 = vmatprep.subr.bf16.mxu0 0
  %1605 = vmatpush1.bf16.msra.mxu0 0
  %1606 = vmatprep.subr.bf16.mxu0 0
  %1607 = vmatpush1.bf16.msra.mxu0 0
  %1608 = vmatprep.subr.bf16.mxu0 0
  %1609 = vmatpush1.bf16.msra.mxu0 0
  %1610 = vmatprep.subr.bf16.mxu0 0
  %1611 = vmatpush1.bf16.msra.mxu0 0
  %1612 = vmatprep.subr.bf16.mxu0 0
  %1613 = vmatpush1.bf16.msra.mxu0 0
  %1614 = vmatprep.subr.bf16.mxu0 0
  %1615 = vmatpush1.bf16.msra.mxu0 0
  %1616 = vmatprep.subr.bf16.mxu0 0
  %1617 = vmatpush1.bf16.msra.mxu0 0
  %1618 = vmatprep.subr.bf16.mxu0 0
  %1619 = vmatpush1.bf16.msra.mxu0 0
  %1620 = vmatprep.mubr.bf16.mxu0 0
  %1621 = vmatmul.mubr.bf16.gmra.mrb[0].mxu0 %v1586
  %v1622 = vpop.f32.mrb[0].mxu0
  %v1623 = vadd.f32 %v1572, %v1622
  %v1624 = vpop.f32.mrb[0].mxu0
  %v1625 = vpop.f32.mrb[0].mxu0
  %v1626 = vadd.f32 %v1572, %v1625
  %v1627 = vpop.f32.mrb[0].mxu0
  %1628 = vdwg.mxu0
  %v1629 = vld [vmem:[%s1 + $0xa0] sm:$0xf]
  %v1630 = vld [vmem:[%s1 + $0xa4] sm:$0xf]
  %v1631 = vld [vmem:[%s1 + $0xa8] sm:$0xf]
  %v1632 = vld [vmem:[%s1 + $0xac] sm:$0xf]
  %v1633 = vpack.c.bf16 %v1558, %v1557
  %v1634 = vpack.c.bf16 %v1560, %v1559
  %v1635 = vld [vmem:[%s2 + $0xc0] sm:$0x1]
  %v1636 = vlaneseq
  %v1637 = vshrl.u32 %v1636, 7
  %v1638 = vsub.s32 0, %v1637
  %v1639 = vrot.slane %v1635, %v1638
  %v1644 = vunpack.c.l.b16 %v1629
  %v1645 = vunpack.c.l.b16 %v1630
  %v1646 = vunpack.c.l.b16 %v1631
  %v1647 = vunpack.c.l.b16 %v1632
  %v1648 = vpack.c.b16 %v1645, %v1644
  %v1649 = vpack.c.b16 %v1647, %v1646
  %v1653 = vsel %vm124, %v1633, 0
  %v1656 = vsel %vm124, %v1634, 0
  %1658 = vmatprep.subr.bf16.mxu0 0
  %1659 = vmatpush1.bf16.msra.mxu0 %v1648
  %1660 = vmatprep.subr.bf16.mxu0 0
  %1661 = vmatpush1.bf16.msra.mxu0 %v1649
  %1662 = vmatprep.subr.bf16.mxu0 0
  %1663 = vmatpush1.bf16.msra.mxu0 0
  %1664 = vmatprep.subr.bf16.mxu0 0
  %1665 = vmatpush1.bf16.msra.mxu0 0
  %1666 = vmatprep.subr.bf16.mxu0 0
  %1667 = vmatpush1.bf16.msra.mxu0 0
  %1668 = vmatprep.subr.bf16.mxu0 0
  %1669 = vmatpush1.bf16.msra.mxu0 0
  %1670 = vmatprep.subr.bf16.mxu0 0
  %1671 = vmatpush1.bf16.msra.mxu0 0
  %1672 = vmatprep.subr.bf16.mxu0 0
  %1673 = vmatpush1.bf16.msra.mxu0 0
  %1674 = vmatprep.subr.bf16.mxu0 0
  %1675 = vmatpush1.bf16.msra.mxu0 0
  %1676 = vmatprep.subr.bf16.mxu0 0
  %1677 = vmatpush1.bf16.msra.mxu0 0
  %1678 = vmatprep.subr.bf16.mxu0 0
  %1679 = vmatpush1.bf16.msra.mxu0 0
  %1680 = vmatprep.subr.bf16.mxu0 0
  %1681 = vmatpush1.bf16.msra.mxu0 0
  %1682 = vmatprep.subr.bf16.mxu0 0
  %1683 = vmatpush1.bf16.msra.mxu0 0
  %1684 = vmatprep.subr.bf16.mxu0 0
  %1685 = vmatpush1.bf16.msra.mxu0 0
  %1686 = vmatprep.subr.bf16.mxu0 0
  %1687 = vmatpush1.bf16.msra.mxu0 0
  %1688 = vmatprep.subr.bf16.mxu0 0
  %1689 = vmatpush1.bf16.msra.mxu0 0
  %1690 = vmatprep.mubr.bf16.mxu0 0
  %1691 = vmatmul.mubr.bf16.gmra.mrb[0].mxu0 %v1653
  %v1692 = vpop.f32.mrb[0].mxu0
  %v1693 = vadd.f32 %v1639, %v1692
  %v1694 = vpop.f32.mrb[0].mxu0
  %v1695 = vpop.f32.mrb[0].mxu0
  %v1696 = vadd.f32 %v1639, %v1695
  %v1697 = vpop.f32.mrb[0].mxu0
  %1698 = vmatprep.mubr.bf16.mxu0 0
  %1699 = vmatmul.mubr.bf16.gmra.mrb[0].mxu0 %v1656
  %v1700 = vpop.f32.mrb[0].mxu0
  %v1701 = vadd.f32 %v1639, %v1700
  %v1702 = vpop.f32.mrb[0].mxu0
  %v1703 = vpop.f32.mrb[0].mxu0
  %v1704 = vadd.f32 %v1639, %v1703
  %v1705 = vpop.f32.mrb[0].mxu0
  %1706 = vdwg.mxu0
  %v1707 = vld [vmem:[%s1 + $0xb0] sm:$0xf]
  %v1708 = vld [vmem:[%s1 + $0xb4] sm:$0xf]
  %v1709 = vld [vmem:[%s1 + $0xb8] sm:$0xf]
  %v1710 = vld [vmem:[%s1 + $0xbc] sm:$0xf]
  %v1711 = vpack.c.bf16 %v1550, %v1549
  %v1712 = vpack.c.bf16 %v1552, %v1551
  %v1713 = vld [vmem:[%s2 + $0xc8] sm:$0x1]
  %v1714 = vlaneseq
  %v1715 = vshrl.u32 %v1714, 7
  %v1716 = vsub.s32 0, %v1715
  %v1717 = vrot.slane %v1713, %v1716
  %v1722 = vunpack.c.l.b16 %v1707
  %v1723 = vunpack.c.l.b16 %v1708
  %v1724 = vunpack.c.l.b16 %v1709
  %v1725 = vunpack.c.l.b16 %v1710
  %v1726 = vpack.c.b16 %v1723, %v1722
  %v1727 = vpack.c.b16 %v1725, %v1724
  %v1731 = vsel %vm124, %v1711, 0
  %v1734 = vsel %vm124, %v1712, 0
  %1736 = vmatprep.subr.bf16.mxu0 0
  %1737 = vmatpush1.bf16.msra.mxu0 %v1726
  %1738 = vmatprep.subr.bf16.mxu0 0
  %1739 = vmatpush1.bf16.msra.mxu0 %v1727
  %1740 = vmatprep.subr.bf16.mxu0 0
  %1741 = vmatpush1.bf16.msra.mxu0 0
  %1742 = vmatprep.subr.bf16.mxu0 0
  %1743 = vmatpush1.bf16.msra.mxu0 0
  %1744 = vmatprep.subr.bf16.mxu0 0
  %1745 = vmatpush1.bf16.msra.mxu0 0
  %1746 = vmatprep.subr.bf16.mxu0 0
  %1747 = vmatpush1.bf16.msra.mxu0 0
  %1748 = vmatprep.subr.bf16.mxu0 0
  %1749 = vmatpush1.bf16.msra.mxu0 0
  %1750 = vmatprep.subr.bf16.mxu0 0
  %1751 = vmatpush1.bf16.msra.mxu0 0
  %1752 = vmatprep.subr.bf16.mxu0 0
  %1753 = vmatpush1.bf16.msra.mxu0 0
  %1754 = vmatprep.subr.bf16.mxu0 0
  %1755 = vmatpush1.bf16.msra.mxu0 0
  %1756 = vmatprep.subr.bf16.mxu0 0
  %1757 = vmatpush1.bf16.msra.mxu0 0
  %1758 = vmatprep.subr.bf16.mxu0 0
  %1759 = vmatpush1.bf16.msra.mxu0 0
  %1760 = vmatprep.subr.bf16.mxu0 0
  %1761 = vmatpush1.bf16.msra.mxu0 0
  %1762 = vmatprep.subr.bf16.mxu0 0
  %1763 = vmatpush1.bf16.msra.mxu0 0
  %1764 = vmatprep.subr.bf16.mxu0 0
  %1765 = vmatpush1.bf16.msra.mxu0 0
  %1766 = vmatprep.subr.bf16.mxu0 0
  %1767 = vmatpush1.bf16.msra.mxu0 0
  %1768 = vmatprep.mubr.bf16.mxu0 0
  %1769 = vmatmul.mubr.bf16.gmra.mrb[0].mxu0 %v1731
  %v1770 = vpop.f32.mrb[0].mxu0
  %v1771 = vadd.f32 %v1717, %v1770
  %v1772 = vpop.f32.mrb[0].mxu0
  %v1773 = vpop.f32.mrb[0].mxu0
  %v1774 = vadd.f32 %v1717, %v1773
  %v1775 = vpop.f32.mrb[0].mxu0
  %1776 = vmatprep.mubr.bf16.mxu0 0
  %1777 = vmatmul.mubr.bf16.gmra.mrb[0].mxu0 %v1734
  %v1778 = vpop.f32.mrb[0].mxu0
  %v1779 = vadd.f32 %v1717, %v1778
  %v1780 = vpop.f32.mrb[0].mxu0
  %v1781 = vpop.f32.mrb[0].mxu0
  %v1782 = vadd.f32 %v1717, %v1781
  %v1783 = vpop.f32.mrb[0].mxu0
  %1784 = vdwg.mxu0
  %v1785 = vmul.f32 %v1623, 0.17677669
  %v1786 = vmul.f32 %v1626, 0.17677669
  %v1787 = vpack.c.bf16 %v1786, %v1785
  %v1788 = vpack.c.bf16 %v1696, %v1693
  %v1789 = vpack.c.bf16 %v1704, %v1701
  %v1790 = vld [vmem:[%s2 + $0x50] sm:$0xff]
  %v1791 = vld [vmem:[%s2 + $0x58] sm:$0xff]
  %v1793 = vsel %vm124, %v1787, 0
  %v1796 = vsel %vm124, %v1788, 0
  %v1799 = vsel %vm124, %v1789, 0
  %1801 = vmatprep.subr.bf16.mxu0 0
  %1802 = vmatpush1.bf16.xpose.msra.mxu0 %v1796
  %1803 = vmatprep.subr.bf16.mxu0 0
  %1804 = vmatpush1.bf16.xpose.msra.mxu0 %v1799
  %1805 = vmatprep.subr.bf16.mxu0 0
  %1806 = vmatpush1.bf16.xpose.msra.mxu0 0
  %1807 = vmatprep.subr.bf16.mxu0 0
  %1808 = vmatpush1.bf16.xpose.msra.mxu0 0
  %1809 = vmatprep.subr.bf16.mxu0 0
  %1810 = vmatpush1.bf16.xpose.msra.mxu0 0
  %1811 = vmatprep.subr.bf16.mxu0 0
  %1812 = vmatpush1.bf16.xpose.msra.mxu0 0
  %1813 = vmatprep.subr.bf16.mxu0 0
  %1814 = vmatpush1.bf16.xpose.msra.mxu0 0
  %1815 = vmatprep.subr.bf16.mxu0 0
  %1816 = vmatpush1.bf16.xpose.msra.mxu0 0
  %1817 = vmatprep.subr.bf16.mxu0 0
  %1818 = vmatpush1.bf16.xpose.msra.mxu0 0
  %1819 = vmatprep.subr.bf16.mxu0 0
  %1820 = vmatpush1.bf16.xpose.msra.mxu0 0
  %1821 = vmatprep.subr.bf16.mxu0 0
  %1822 = vmatpush1.bf16.xpose.msra.mxu0 0
  %1823 = vmatprep.subr.bf16.mxu0 0
  %1824 = vmatpush1.bf16.xpose.msra.mxu0 0
  %1825 = vmatprep.subr.bf16.mxu0 0
  %1826 = vmatpush1.bf16.xpose.msra.mxu0 0
  %1827 = vmatprep.subr.bf16.mxu0 0
  %1828 = vmatpush1.bf16.xpose.msra.mxu0 0
  %1829 = vmatprep.subr.bf16.mxu0 0
  %1830 = vmatpush1.bf16.xpose.msra.mxu0 0
  %1831 = vmatprep.subr.bf16.mxu0 0
  %1832 = vmatpush1.bf16.xpose.msra.mxu0 0
  %1833 = vmatprep.mubr.bf16.mxu0 0
  %1834 = vmatmul.mubr.bf16.gmra.mrb[0].mxu0 %v1793
  %v1835 = vpop.f32.mrb[0].mxu0
  %v1836 = vadd.f32 %v1790, %v1835
  %v1837 = vpop.f32.mrb[0].mxu0
  %v1838 = vpop.f32.mrb[0].mxu0
  %v1839 = vadd.f32 %v1791, %v1838
  %v1840 = vpop.f32.mrb[0].mxu0
  %1841 = vdwg.mxu0
  %v1842 = vsel %vm124, %v1836, -inf
  %1843 = vmax.xlane.f32.xlu0 %v1842
  %v1844 = vpop.xlane.xlu0 %1843
  %v1845 = vsel %vm124, %v1839, -inf
  %1846 = vmax.xlane.f32.xlu0 %v1845
  %v1847 = vpop.xlane.xlu0 %1846
  %v1848 = vsub.f32 %v1836, %v1844
  %v1849 = vsub.f32 %v1839, %v1847
  %v1850 = vmul.f32 %v1848, 1.442695
  %v1851 = vpow.pop %v1850
  %v1852 = vmul.f32 %v1849, 1.442695
  %v1853 = vpow.pop %v1852
  %v1854 = vsel %vm124, %v1851, 0.0
  %1855 = vadd.xlane.f32.xlu0 %v1854
  %v1856 = vpop.xlane.xlu0 %1855
  %v1857 = vsel %vm124, %v1853, 0.0
  %1858 = vadd.xlane.f32.xlu0 %v1857
  %v1859 = vpop.xlane.xlu0 %1858
  %v1860 = vrcp.pop %v1856
  %v1861 = vrcp.pop %v1859
  %v1862 = vmul.f32 %v1851, %v1860
  %v1863 = vmul.f32 %v1853, %v1861
  %v1864 = vpack.c.bf16 %v1863, %v1862
  %v1865 = vpack.c.bf16 %v1774, %v1771
  %v1866 = vpack.c.bf16 %v1782, %v1779
  %v1868 = vsel %vm124, %v1864, 0
  %1870 = vmatprep.subr.bf16.mxu0 0
  %1871 = vmatpush1.bf16.msra.mxu0 %v1865
  %1872 = vmatprep.subr.bf16.mxu0 0
  %1873 = vmatpush1.bf16.msra.mxu0 %v1866
  %1874 = vmatprep.subr.bf16.mxu0 0
  %1875 = vmatpush1.bf16.msra.mxu0 0
  %1876 = vmatprep.subr.bf16.mxu0 0
  %1877 = vmatpush1.bf16.msra.mxu0 0
  %1878 = vmatprep.subr.bf16.mxu0 0
  %1879 = vmatpush1.bf16.msra.mxu0 0
  %1880 = vmatprep.subr.bf16.mxu0 0
  %1881 = vmatpush1.bf16.msra.mxu0 0
  %1882 = vmatprep.subr.bf16.mxu0 0
  %1883 = vmatpush1.bf16.msra.mxu0 0
  %1884 = vmatprep.subr.bf16.mxu0 0
  %1885 = vmatpush1.bf16.msra.mxu0 0
  %1886 = vmatprep.subr.bf16.mxu0 0
  %1887 = vmatpush1.bf16.msra.mxu0 0
  %1888 = vmatprep.subr.bf16.mxu0 0
  %1889 = vmatpush1.bf16.msra.mxu0 0
  %1890 = vmatprep.subr.bf16.mxu0 0
  %1891 = vmatpush1.bf16.msra.mxu0 0
  %1892 = vmatprep.subr.bf16.mxu0 0
  %1893 = vmatpush1.bf16.msra.mxu0 0
  %1894 = vmatprep.subr.bf16.mxu0 0
  %1895 = vmatpush1.bf16.msra.mxu0 0
  %1896 = vmatprep.subr.bf16.mxu0 0
  %1897 = vmatpush1.bf16.msra.mxu0 0
  %1898 = vmatprep.subr.bf16.mxu0 0
  %1899 = vmatpush1.bf16.msra.mxu0 0
  %1900 = vmatprep.subr.bf16.mxu0 0
  %1901 = vmatpush1.bf16.msra.mxu0 0
  %1902 = vmatprep.mubr.bf16.mxu0 0
  %1903 = vmatmul.mubr.bf16.gmra.mrb[0].mxu0 %v1868
  %v1904 = vpop.f32.mrb[0].mxu0
  %v1905 = vadd.f32 0.0, %v1904
  %v1906 = vpop.f32.mrb[0].mxu0
  %v1907 = vpop.f32.mrb[0].mxu0
  %v1908 = vadd.f32 0.0, %v1907
  %v1909 = vpop.f32.mrb[0].mxu0
  %1910 = vdwg.mxu0
  %v1911 = vld [vmem:[%s1 + $0xc0] sm:$0xf]
  %v1912 = vld [vmem:[%s1 + $0xc4] sm:$0xf]
  %v1913 = vld [vmem:[%s1 + $0xc8] sm:$0xf]
  %v1914 = vld [vmem:[%s1 + $0xcc] sm:$0xf]
  %v1915 = vpack.c.bf16 %v1908, %v1905
  %v1920 = vunpack.c.l.b16 %v1911
  %v1921 = vunpack.c.l.b16 %v1912
  %v1922 = vunpack.c.l.b16 %v1913
  %v1923 = vunpack.c.l.b16 %v1914
  %v1924 = vpack.c.b16 %v1921, %v1920
  %v1925 = vpack.c.b16 %v1923, %v1922
  %v1929 = vsel %vm124, %v1915, 0
  %1931 = vmatprep.subr.bf16.mxu0 0
  %1932 = vmatpush1.bf16.msra.mxu0 %v1924
  %1933 = vmatprep.subr.bf16.mxu0 0
  %1934 = vmatpush1.bf16.msra.mxu0 %v1925
  %1935 = vmatprep.subr.bf16.mxu0 0
  %1936 = vmatpush1.bf16.msra.mxu0 0
  %1937 = vmatprep.subr.bf16.mxu0 0
  %1938 = vmatpush1.bf16.msra.mxu0 0
  %1939 = vmatprep.subr.bf16.mxu0 0
  %1940 = vmatpush1.bf16.msra.mxu0 0
  %1941 = vmatprep.subr.bf16.mxu0 0
  %1942 = vmatpush1.bf16.msra.mxu0 0
  %1943 = vmatprep.subr.bf16.mxu0 0
  %1944 = vmatpush1.bf16.msra.mxu0 0
  %1945 = vmatprep.subr.bf16.mxu0 0
  %1946 = vmatpush1.bf16.msra.mxu0 0
  %1947 = vmatprep.subr.bf16.mxu0 0
  %1948 = vmatpush1.bf16.msra.mxu0 0
  %1949 = vmatprep.subr.bf16.mxu0 0
  %1950 = vmatpush1.bf16.msra.mxu0 0
  %1951 = vmatprep.subr.bf16.mxu0 0
  %1952 = vmatpush1.bf16.msra.mxu0 0
  %1953 = vmatprep.subr.bf16.mxu0 0
  %1954 = vmatpush1.bf16.msra.mxu0 0
  %1955 = vmatprep.subr.bf16.mxu0 0
  %1956 = vmatpush1.bf16.msra.mxu0 0
  %1957 = vmatprep.subr.bf16.mxu0 0
  %1958 = vmatpush1.bf16.msra.mxu0 0
  %1959 = vmatprep.subr.bf16.mxu0 0
  %1960 = vmatpush1.bf16.msra.mxu0 0
  %1961 = vmatprep.subr.bf16.mxu0 0
  %1962 = vmatpush1.bf16.msra.mxu0 0
  %1963 = vmatprep.mubr.bf16.mxu0 0
  %1964 = vmatmul.mubr.bf16.gmra.mrb[0].mxu0 %v1929
  %v1965 = vpop.f32.mrb[0].mxu0
  %v1966 = vadd.f32 0.0, %v1965
  %v1967 = vpop.f32.mrb[0].mxu0
  %v1968 = vpop.f32.mrb[0].mxu0
  %v1969 = vadd.f32 0.0, %v1968
  %v1970 = vpop.f32.mrb[0].mxu0
  %1971 = vdwg.mxu0
  %v1972 = vadd.f32 %v1561, %v1966
  %v1973 = vadd.f32 %v1562, %v1969
  %v1974 = vld [vmem:[%s2 + $0xd0] sm:$0x1]
  %v1975 = vlaneseq
  %v1976 = vshrl.u32 %v1975, 7
  %v1977 = vsub.s32 0, %v1976
  %v1978 = vrot.slane %v1974, %v1977
  %v1979 = vadd.f32 %v1972, %v1978
  %v1980 = vadd.f32 %v1973, %v1978
  %v1981 = vld [vmem:[%s2 + $0xd8] sm:$0x1]
  %v1982 = vld [vmem:[%s2 + $0xe0] sm:$0x1]
  %v1983 = vsel %vm124, %v1979, 0.0
  %1984 = vadd.xlane.f32.xlu0 %v1983
  %v1985 = vpop.xlane.xlu0 %1984
  %v1986 = vsel %vm124, %v1980, 0.0
  %1987 = vadd.xlane.f32.xlu0 %v1986
  %v1988 = vpop.xlane.xlu0 %1987
  %v1989 = vmul.f32 %v1985, %v137
  %v1990 = vmul.f32 %v1988, %v137
  %v1991 = vsub.f32 %v1979, %v1989
  %v1992 = vsub.f32 %v1980, %v1990
  %v1993 = vmul.f32 %v1991, %v1991
  %v1994 = vmul.f32 %v1992, %v1992
  %v1995 = vsel %vm124, %v1993, 0.0
  %1996 = vadd.xlane.f32.xlu0 %v1995
  %v1997 = vpop.xlane.xlu0 %1996
  %v1998 = vsel %vm124, %v1994, 0.0
  %1999 = vadd.xlane.f32.xlu0 %v1998
  %v2000 = vpop.xlane.xlu0 %1999
  %v2001 = vmul.f32 %v1997, %v137
  %v2002 = vmul.f32 %v2000, %v137
  %v2003 = vadd.f32 %v2001, 1e-06
  %v2004 = vadd.f32 %v2002, 1e-06
  %v2005 = vrsqrt.pop %v2003
  %v2006 = vrsqrt.pop %v2004
  %v2007 = vmul.f32 %v1991, %v2005
  %v2008 = vmul.f32 %v1992, %v2006
  %v2009 = vlaneseq
  %v2010 = vshrl.u32 %v2009, 7
  %v2011 = vsub.s32 0, %v2010
  %v2012 = vrot.slane %v1981, %v2011
  %v2013 = vmul.f32 %v2007, %v2012
  %v2014 = vmul.f32 %v2008, %v2012
  %v2015 = vlaneseq
  %v2016 = vshrl.u32 %v2015, 7
  %v2017 = vsub.s32 0, %v2016
  %v2018 = vrot.slane %v1982, %v2017
  %v2019 = vadd.f32 %v2013, %v2018
  %v2020 = vadd.f32 %v2014, %v2018
  %v2021 = vpack.c.bf16 %v2020, %v2019
  %v2022 = vld [vmem:[%s1 + $0xd0] sm:$0xf]
  %v2023 = vld [vmem:[%s1 + $0xd4] sm:$0xf]
  %v2024 = vld [vmem:[%s1 + $0xd8] sm:$0xf]
  %v2025 = vld [vmem:[%s1 + $0xdc] sm:$0xf]
  %v2026 = vld [vmem:[%s2 + $0xe8] sm:$0x1]
  %v2027 = vlaneseq
  %v2028 = vshrl.u32 %v2027, 7
  %v2029 = vsub.s32 0, %v2028
  %v2030 = vrot.slane %v2026, %v2029
  %v2035 = vunpack.c.l.b16 %v2022
  %v2036 = vunpack.c.l.b16 %v2023
  %v2037 = vunpack.c.l.b16 %v2024
  %v2038 = vunpack.c.l.b16 %v2025
  %v2039 = vpack.c.b16 %v2036, %v2035
  %v2040 = vpack.c.b16 %v2038, %v2037
  %v2044 = vsel %vm124, %v2021, 0
  %2046 = vmatprep.subr.bf16.mxu0 0
  %2047 = vmatpush1.bf16.msra.mxu0 %v2039
  %2048 = vmatprep.subr.bf16.mxu0 0
  %2049 = vmatpush1.bf16.msra.mxu0 %v2040
  %2050 = vmatprep.subr.bf16.mxu0 0
  %2051 = vmatpush1.bf16.msra.mxu0 0
  %2052 = vmatprep.subr.bf16.mxu0 0
  %2053 = vmatpush1.bf16.msra.mxu0 0
  %2054 = vmatprep.subr.bf16.mxu0 0
  %2055 = vmatpush1.bf16.msra.mxu0 0
  %2056 = vmatprep.subr.bf16.mxu0 0
  %2057 = vmatpush1.bf16.msra.mxu0 0
  %2058 = vmatprep.subr.bf16.mxu0 0
  %2059 = vmatpush1.bf16.msra.mxu0 0
  %2060 = vmatprep.subr.bf16.mxu0 0
  %2061 = vmatpush1.bf16.msra.mxu0 0
  %2062 = vmatprep.subr.bf16.mxu0 0
  %2063 = vmatpush1.bf16.msra.mxu0 0
  %2064 = vmatprep.subr.bf16.mxu0 0
  %2065 = vmatpush1.bf16.msra.mxu0 0
  %2066 = vmatprep.subr.bf16.mxu0 0
  %2067 = vmatpush1.bf16.msra.mxu0 0
  %2068 = vmatprep.subr.bf16.mxu0 0
  %2069 = vmatpush1.bf16.msra.mxu0 0
  %2070 = vmatprep.subr.bf16.mxu0 0
  %2071 = vmatpush1.bf16.msra.mxu0 0
  %2072 = vmatprep.subr.bf16.mxu0 0
  %2073 = vmatpush1.bf16.msra.mxu0 0
  %2074 = vmatprep.subr.bf16.mxu0 0
  %2075 = vmatpush1.bf16.msra.mxu0 0
  %2076 = vmatprep.subr.bf16.mxu0 0
  %2077 = vmatpush1.bf16.msra.mxu0 0
  %2078 = vmatprep.mubr.bf16.mxu0 0
  %2079 = vmatmul.mubr.bf16.gmra.mrb[0].mxu0 %v2044
  %v2080 = vpop.f32.mrb[0].mxu0
  %v2081 = vadd.f32 %v2030, %v2080
  %v2082 = vpop.f32.mrb[0].mxu0
  %v2083 = vpop.f32.mrb[0].mxu0
  %v2084 = vadd.f32 %v2030, %v2083
  %v2085 = vpop.f32.mrb[0].mxu0
  %2086 = vdwg.mxu0
  %v2087 = vld [vmem:[%s1 + $0xe0] sm:$0xf]
  %v2088 = vld [vmem:[%s1 + $0xe4] sm:$0xf]
  %v2089 = vld [vmem:[%s1 + $0xe8] sm:$0xf]
  %v2090 = vld [vmem:[%s1 + $0xec] sm:$0xf]
  %v2091 = vld [vmem:[%s2 + $0xf0] sm:$0x1]
  %v2092 = vlaneseq
  %v2093 = vshrl.u32 %v2092, 7
  %v2094 = vsub.s32 0, %v2093
  %v2095 = vrot.slane %v2091, %v2094
  %v2100 = vunpack.c.l.b16 %v2087
  %v2101 = vunpack.c.l.b16 %v2088
  %v2102 = vunpack.c.l.b16 %v2089
  %v2103 = vunpack.c.l.b16 %v2090
  %v2104 = vpack.c.b16 %v2101, %v2100
  %v2105 = vpack.c.b16 %v2103, %v2102
  %2108 = vmatprep.subr.bf16.mxu0 0
  %2109 = vmatpush1.bf16.msra.mxu0 %v2104
  %2110 = vmatprep.subr.bf16.mxu0 0
  %2111 = vmatpush1.bf16.msra.mxu0 %v2105
  %2112 = vmatprep.subr.bf16.mxu0 0
  %2113 = vmatpush1.bf16.msra.mxu0 0
  %2114 = vmatprep.subr.bf16.mxu0 0
  %2115 = vmatpush1.bf16.msra.mxu0 0
  %2116 = vmatprep.subr.bf16.mxu0 0
  %2117 = vmatpush1.bf16.msra.mxu0 0
  %2118 = vmatprep.subr.bf16.mxu0 0
  %2119 = vmatpush1.bf16.msra.mxu0 0
  %2120 = vmatprep.subr.bf16.mxu0 0
  %2121 = vmatpush1.bf16.msra.mxu0 0
  %2122 = vmatprep.subr.bf16.mxu0 0
  %2123 = vmatpush1.bf16.msra.mxu0 0
  %2124 = vmatprep.subr.bf16.mxu0 0
  %2125 = vmatpush1.bf16.msra.mxu0 0
  %2126 = vmatprep.subr.bf16.mxu0 0
  %2127 = vmatpush1.bf16.msra.mxu0 0
  %2128 = vmatprep.subr.bf16.mxu0 0
  %2129 = vmatpush1.bf16.msra.mxu0 0
  %2130 = vmatprep.subr.bf16.mxu0 0
  %2131 = vmatpush1.bf16.msra.mxu0 0
  %2132 = vmatprep.subr.bf16.mxu0 0
  %2133 = vmatpush1.bf16.msra.mxu0 0
  %2134 = vmatprep.subr.bf16.mxu0 0
  %2135 = vmatpush1.bf16.msra.mxu0 0
  %2136 = vmatprep.subr.bf16.mxu0 0
  %2137 = vmatpush1.bf16.msra.mxu0 0
  %2138 = vmatprep.subr.bf16.mxu0 0
  %2139 = vmatpush1.bf16.msra.mxu0 0
  %2140 = vmatprep.mubr.bf16.mxu0 0
  %2141 = vmatmul.mubr.bf16.gmra.mrb[0].mxu0 %v2044
  %v2142 = vpop.f32.mrb[0].mxu0
  %v2143 = vadd.f32 %v2095, %v2142
  %v2144 = vpop.f32.mrb[0].mxu0
  %v2145 = vpop.f32.mrb[0].mxu0
  %v2146 = vadd.f32 %v2095, %v2145
  %v2147 = vpop.f32.mrb[0].mxu0
  %2148 = vdwg.mxu0
  %v2149 = vpack.c.bf16 %v2146, %v2143
  %v2151 = vsel %vm124, %v2149, 0
  %2153 = vmatprep.subr.bf16.mxu0 0
  %2154 = vmatpush1.bf16.xpose.msra.mxu0 %v1653
  %2155 = vmatprep.subr.bf16.mxu0 0
  %2156 = vmatpush1.bf16.xpose.msra.mxu0 %v1656
  %2157 = vmatprep.subr.bf16.mxu0 0
  %2158 = vmatpush1.bf16.xpose.msra.mxu0 0
  %2159 = vmatprep.subr.bf16.mxu0 0
  %2160 = vmatpush1.bf16.xpose.msra.mxu0 0
  %2161 = vmatprep.subr.bf16.mxu0 0
  %2162 = vmatpush1.bf16.xpose.msra.mxu0 0
  %2163 = vmatprep.subr.bf16.mxu0 0
  %2164 = vmatpush1.bf16.xpose.msra.mxu0 0
  %2165 = vmatprep.subr.bf16.mxu0 0
  %2166 = vmatpush1.bf16.xpose.msra.mxu0 0
  %2167 = vmatprep.subr.bf16.mxu0 0
  %2168 = vmatpush1.bf16.xpose.msra.mxu0 0
  %2169 = vmatprep.subr.bf16.mxu0 0
  %2170 = vmatpush1.bf16.xpose.msra.mxu0 0
  %2171 = vmatprep.subr.bf16.mxu0 0
  %2172 = vmatpush1.bf16.xpose.msra.mxu0 0
  %2173 = vmatprep.subr.bf16.mxu0 0
  %2174 = vmatpush1.bf16.xpose.msra.mxu0 0
  %2175 = vmatprep.subr.bf16.mxu0 0
  %2176 = vmatpush1.bf16.xpose.msra.mxu0 0
  %2177 = vmatprep.subr.bf16.mxu0 0
  %2178 = vmatpush1.bf16.xpose.msra.mxu0 0
  %2179 = vmatprep.subr.bf16.mxu0 0
  %2180 = vmatpush1.bf16.xpose.msra.mxu0 0
  %2181 = vmatprep.subr.bf16.mxu0 0
  %2182 = vmatpush1.bf16.xpose.msra.mxu0 0
  %2183 = vmatprep.subr.bf16.mxu0 0
  %2184 = vmatpush1.bf16.xpose.msra.mxu0 0
  %2185 = vmatprep.mubr.bf16.mxu0 0
  %2186 = vmatmul.mubr.bf16.gmra.mrb[0].mxu0 %v2151
  %v2187 = vpop.f32.mrb[0].mxu0
  %v2188 = vadd.f32 0.0, %v2187
  %v2189 = vpop.f32.mrb[0].mxu0
  %v2190 = vpop.f32.mrb[0].mxu0
  %v2191 = vadd.f32 0.0, %v2190
  %v2192 = vpop.f32.mrb[0].mxu0
  %2193 = vdwg.mxu0
  %2196 = vrot.lane.b32.xlu0 %v2188, 4
  %v2197 = vpop.permute.xlu0 %2196
  %2198 = vrot.lane.b32.xlu0 %v2191, 4
  %v2199 = vpop.permute.xlu0 %2198
  %vm2202 = vcmask 31744
  %v2203 = vsel %vm2202, %v2081, %v2197
  %v2204 = vsel %vm2202, %v2084, %v2199
  %vm2205 = vcmask 293888
  %v2206 = vsel %vm2205, %v2203, 0.0
  %v2207 = vsel %vm2205, %v2204, 0.0
  %2208 = vst [vmem:[%s3] sm:$0xff] %v2206
  %2209 = vst [vmem:[%s3 + $0x8] sm:$0xff] %v2207
  // Predicated region
  $region14: #{vitu_forward.1} parent=0 // pred_check
    _
  $region15: #{vitu_forward.1} parent=0 // pred_check_branch
    %2211 = sbr.rel (0) target = $region17
  $region16: #{vitu_forward.1} parent=0 // pred_region
    _
  $region17: #{vitu_forward.1} parent=0 // pred_fallthru
    _
  // Predicated region
  $region18: #{vitu_forward.1} parent=0 // pred_check
    _
  $region19: #{vitu_forward.1} parent=0 // pred_check_branch
    %2213 = sbr.rel (0) target = $region21
  $region20: #{vitu_forward.1} parent=0 // pred_region
    _
  $region21: #{vitu_forward.1} parent=0 // pred_fallthru
    _

</llo_original>
